<compile_context>
chip_gen: v7x
topology: tpu7x:2x2x1
jax: 0.10.0
libtpu: 0.0.40
codegen_flags: <defaults>
</compile_context>

<pallas_src>
import math
from functools import partial

import jax
import jax.numpy as jnp
from jax import lax
from jax.experimental import pallas as pl
from jax.experimental.pallas import tpu as pltpu


def _palayer_kernel(x_ref, w1_ref, b1_ref, w2_ref, b2_ref, mask_ref, o_ref,
                    stack_ref, mid_ref, *,
                    C, M1, Wp, Lv_pad, Lext, Lcopy, store_off,
                    Wcomp1, Wcomp2, Bb):
    """Bb images per step, both 3x3 convs fused.

    x_ref:     (C, Bb*Lext)   bf16 zero-padded inputs, one flat chunk per image
    w1_ref:    (M1, 9*C)      bf16 conv1 weight, tap-major along K
    b1_ref:    (M1, 1)        f32
    w2_ref:    (9, M1, 1)     f32 conv2 weight, per-tap broadcast columns
    b2_ref:    (1, 1)         f32
    mask_ref:  (1, Bb*Lext)   f32, 1.0 on real pixel columns of each chunk
    o_ref:     (1, 1, Bb*Lv_pad)
    stack_ref: (9*C, Wcomp1)  bf16 scratch: stacked shifted conv1 operand
    mid_ref:   (M1, Bb*Lext)  f32 scratch: re-padded conv1 activation
    """
    shifts = [dy * Wp + dx for dy in range(3) for dx in range(3)]

    # ---- conv1: stack 9 lane-shifted copies -> ONE MXU matmul with K = 9*C ----
    for t, s in enumerate(shifts):
        stack_ref[t * C:(t + 1) * C, :] = x_ref[:, pl.ds(s, Wcomp1)]
    acc1 = jnp.dot(w1_ref[...], stack_ref[...],
                   preferred_element_type=jnp.float32)            # (M1, Wcomp1) f32
    # bias + ReLU in f32; mask zeroes junk columns (w >= W, j >= Lv) so they act
    # as conv2's horizontal / bottom zero padding.
    y1 = jnp.maximum(acc1 + b1_ref[...], 0.0) * mask_ref[:, :Wcomp1]

    # ---- re-pad the intermediate into mid (per-chunk period Lext) -------------
    # chunk layout: [0, store_off) = 0 | [store_off, store_off+Lcopy) = y1 |
    #               [store_off+Lcopy, Lext) = 0.  Only borders are zeroed.
    tail_off = store_off + Lcopy
    tail_w = Lext - tail_off
    zero_lead = jnp.zeros((M1, store_off), jnp.float32)
    zero_tail = jnp.zeros((M1, tail_w), jnp.float32)
    for b in range(Bb):
        base = b * Lext
        mid_ref[:, pl.ds(base, store_off)] = zero_lead
        mid_ref[:, pl.ds(base + store_off, Lcopy)] = y1[:, base:base + Lcopy]
        mid_ref[:, pl.ds(base + tail_off, tail_w)] = zero_tail

    # ---- conv2: 1 output channel, 9 taps on the VPU + one sublane reduce ------
    shift0 = store_off - (Wp + 1)      # mid column holding padded-flat index 0
    acc2 = jnp.zeros((M1, Wcomp2), jnp.float32)
    for t, s in enumerate(shifts):
        acc2 = acc2 + w2_ref[t] * mid_ref[:, pl.ds(shift0 + s, Wcomp2)]
    att = jnp.maximum(jnp.sum(acc2, axis=0, keepdims=True) + b2_ref[...], 0.0)

    # ---- lane-dense, 128-aligned per-chunk output stores ----------------------
    for b in range(Bb):
        o_ref[0, :, pl.ds(b * Lv_pad, Lv_pad)] = (
            att[:, b * Lext:b * Lext + Lv_pad].astype(o_ref.dtype))


def palayer(x, w1, b1, w2, b2, *, block_batch=None):
    """x: (B, C, H, W) NCHW.  w1: (M1, C, 3, 3), b1: (M1,), w2: (1, M1, 3, 3),
    b2: (1,).  Returns the attention map (B, 1, H, W) = PALayer.forward(x)."""
    B, C, H, W = x.shape
    M1 = w1.shape[0]

    rnd128 = lambda v: ((v + 127) // 128) * 128
    Wp = W + 2
    Lv = H * Wp                        # flat conv-output length (2 junk cols/row)
    Lp = (H + 2) * Wp                  # flat zero-padded input plane length
    max_shift = 2 * Wp + 2
    store_off = rnd128(Wp + 1)         # aligned mid column for padded-flat idx Wp+1
    Lcopy = rnd128(Lv + Wp)            # masked y1 copy width (>= Lv + Wp)
    Lv_pad = rnd128(Lv)                # per-image output chunk width
    Lext = rnd128(max(Lcopy + max_shift, store_off + Lcopy + Wp + 1, Lp))

    if block_batch is None:            # fatten each grid step to >= ~1024 lanes
        block_batch = max(1, min(B, -(-1024 // Lext)))
    Bb = int(block_batch)
    nsteps = -(-B // Bb)
    B_pad = nsteps * Bb

    Wcomp1 = (Bb - 1) * Lext + Lcopy   # conv1 computed width per step
    Wcomp2 = (Bb - 1) * Lext + Lv_pad  # conv2 computed width per step

    # ---- input prep (one fused XLA pass): zero-pad spatially, channels-major,
    #      flatten (batch, spatial) onto lanes, cast to bf16 for the MXU.
    # TODO(synk): the halo could be built in-kernel (pl.ANY + masked loads) to
    # avoid this extra padded copy of the input in HBM.
    xp = jnp.pad(x, ((0, B_pad - B), (0, 0), (1, 1), (1, 1)))
    xp = jnp.transpose(xp, (1, 0, 2, 3)).reshape(C, B_pad, Lp)
    xp = jnp.pad(xp, ((0, 0), (0, 0), (0, Lext - Lp)))
    xp = xp.reshape(C, B_pad * Lext).astype(jnp.bfloat16)

    # conv1 weight repacked tap-major along K: w1p[m, t*C + c] = w1[m, c, dy, dx]
    w1p = jnp.transpose(w1, (2, 3, 1, 0)).reshape(9 * C, M1).T.astype(jnp.bfloat16)
    b1c = b1.reshape(M1, 1).astype(jnp.float32)
    # conv2 weight as per-tap (M1, 1) broadcast columns (f32, used on the VPU)
    w2p = jnp.transpose(w2, (2, 3, 1, 0)).reshape(9, M1, 1).astype(jnp.float32)
    b2c = b2.reshape(1, 1).astype(jnp.float32)

    # validity mask: 1.0 on real pixel columns of each chunk, 0 on junk / tail
    cols = jnp.arange(Lext, dtype=jnp.int32)
    chunk_mask = ((cols < Lv) & (cols % Wp < W)).astype(jnp.float32)
    mask = jnp.tile(chunk_mask, (Bb,)).reshape(1, Bb * Lext)

    kernel = partial(_palayer_kernel, C=C, M1=M1, Wp=Wp, Lv_pad=Lv_pad,
                     Lext=Lext, Lcopy=Lcopy, store_off=store_off,
                     Wcomp1=Wcomp1, Wcomp2=Wcomp2, Bb=Bb)

    out_flat = pl.pallas_call(
        kernel,
        out_shape=jax.ShapeDtypeStruct((nsteps, 1, Bb * Lv_pad), x.dtype),
        grid_spec=pltpu.PrefetchScalarGridSpec(
            num_scalar_prefetch=0,
            grid=(nsteps,),
            in_specs=[
                pl.BlockSpec((C, Bb * Lext), lambda i: (0, i)),      # Bb images / step
                pl.BlockSpec((M1, 9 * C), lambda i: (0, 0)),         # resident weights
                pl.BlockSpec((M1, 1), lambda i: (0, 0)),
                pl.BlockSpec((9, M1, 1), lambda i: (0, 0, 0)),
                pl.BlockSpec((1, 1), lambda i: (0, 0)),
                pl.BlockSpec((1, Bb * Lext), lambda i: (0, 0)),
            ],
            out_specs=pl.BlockSpec((1, 1, Bb * Lv_pad), lambda i: (i, 0, 0)),
            scratch_shapes=[
                pltpu.VMEM((9 * C, Wcomp1), jnp.bfloat16),   # stacked conv1 operand
                pltpu.VMEM((M1, Bb * Lext), jnp.float32),    # re-padded conv1 act.
            ]),
        compiler_params=pltpu.CompilerParams(
            dimension_semantics=("parallel",),
            vmem_limit_bytes=32 * 1024 * 1024),
    )(xp, w1p, b1c, w2p, b2c, mask)

    # drop junk columns / padded batches and restore (B, 1, H, W)
    out = out_flat.reshape(nsteps * Bb, Lv_pad)[:B, :Lv]
    return out.reshape(B, H, Wp)[:, :, :W].reshape(B, 1, H, W)


def _reference(x, w1, b1, w2, b2):
    y = lax.conv_general_dilated(x, w1, (1, 1), [(1, 1), (1, 1)],
                                 dimension_numbers=("NCHW", "OIHW", "NCHW"),
                                 precision=lax.Precision.HIGHEST)
    y = jnp.maximum(y + b1.reshape(1, -1, 1, 1), 0.0)
    y = lax.conv_general_dilated(y, w2, (1, 1), [(1, 1), (1, 1)],
                                 dimension_numbers=("NCHW", "OIHW", "NCHW"),
                                 precision=lax.Precision.HIGHEST)
    return jnp.maximum(y + b2.reshape(1, -1, 1, 1), 0.0)


if __name__ == "__main__":
    # Small shapes consistent with the module: channel=32, reduction=4 -> mid=8.
    B, C, H, W = 2, 32, 16, 16
    reduction = 4
    M1 = C // reduction

    key = jax.random.PRNGKey(0)
    kx, k1, k2, k3, k4 = jax.random.split(key, 5)

    x = jax.random.normal(kx, (B, C, H, W), dtype=jnp.float32)
    w1 = jax.random.normal(k1, (M1, C, 3, 3), dtype=jnp.float32) * math.sqrt(2.0 / (C * 9))
    b1 = jax.random.normal(k2, (M1,), dtype=jnp.float32) * 0.1
    w2 = jax.random.normal(k3, (1, M1, 3, 3), dtype=jnp.float32) * math.sqrt(2.0 / (M1 * 9))
    b2 = jax.random.normal(k4, (1,), dtype=jnp.float32) * 0.1

    out = jax.block_until_ready(palayer(x, w1, b1, w2, b2))
    ref = _reference(x, w1, b1, w2, b2)

    assert out.shape == (B, 1, H, W)
    max_err = float(jnp.max(jnp.abs(out - ref)))
    # bf16 matmul operands vs. f32 HIGHEST reference -> relaxed tolerance
    assert jnp.allclose(out, ref, atol=5e-2, rtol=5e-2), max_err

    print("KERNEL_OK")
</pallas_src>

<mosaic_0001>
module attributes {stable_mosaic.version = 11 : i64} {
  func.func @_palayer_kernel(%arg0: i32, %arg1: memref<32x1280xbf16, #tpu.memory_space<vmem>>, %arg2: memref<8x288xbf16, #tpu.memory_space<vmem>>, %arg3: memref<8x1xf32, #tpu.memory_space<vmem>>, %arg4: memref<9x8x1xf32, #tpu.memory_space<vmem>>, %arg5: memref<1x1xf32, #tpu.memory_space<vmem>>, %arg6: memref<1x1280xf32, #tpu.memory_space<vmem>>, %arg7: memref<1x1x768xf32, #tpu.memory_space<vmem>>, %arg8: memref<288x1024xbf16, #tpu.memory_space<vmem>>, %arg9: memref<8x1280xf32, #tpu.memory_space<vmem>>) attributes {dimension_semantics = [#tpu.dimension_semantics<parallel>], iteration_bounds = array<i64: 1>, scalar_prefetch = 0 : i64, scratch_operands = 2 : i64, tpu.core_type = #tpu.core_type<tc>, window_params = [{transform_indices = @transform_0, window_bounds = array<i64: 32, 1280>}, {pipeline_mode = #tpu.pipeline_mode<synchronous>, transform_indices = @transform_1, window_bounds = array<i64: 8, 288>}, {pipeline_mode = #tpu.pipeline_mode<synchronous>, transform_indices = @transform_2, window_bounds = array<i64: 8, 1>}, {pipeline_mode = #tpu.pipeline_mode<synchronous>, transform_indices = @transform_3, window_bounds = array<i64: 9, 8, 1>}, {pipeline_mode = #tpu.pipeline_mode<synchronous>, transform_indices = @transform_4, window_bounds = array<i64: 1, 1>}, {pipeline_mode = #tpu.pipeline_mode<synchronous>, transform_indices = @transform_5, window_bounds = array<i64: 1, 1280>}, {transform_indices = @transform_6, window_bounds = array<i64: 1, 1, 768>}]} {
    %c0 = arith.constant 0 : index
    %c0_0 = arith.constant 0 : index
    %0 = vector.load %arg1[%c0, %c0_0] : memref<32x1280xbf16, #tpu.memory_space<vmem>>, vector<32x1024xbf16>
    %c0_1 = arith.constant 0 : index
    %c0_2 = arith.constant 0 : index
    %1 = vector.load %arg8[%c0_1, %c0_2] : memref<288x1024xbf16, #tpu.memory_space<vmem>>, vector<32x1024xbf16>
    tpu.vector_store %arg8[%c0_1, %c0_2], %0 {strides = array<i32>} : memref<288x1024xbf16, #tpu.memory_space<vmem>>, vector<32x1024xbf16>,
    %c0_3 = arith.constant 0 : index
    %c1 = arith.constant 1 : index
    %2 = vector.load %arg1[%c0_3, %c1] : memref<32x1280xbf16, #tpu.memory_space<vmem>>, vector<32x1024xbf16>
    %c32 = arith.constant 32 : index
    %c0_4 = arith.constant 0 : index
    %3 = vector.load %arg8[%c32, %c0_4] : memref<288x1024xbf16, #tpu.memory_space<vmem>>, vector<32x1024xbf16>
    tpu.vector_store %arg8[%c32, %c0_4], %2 {strides = array<i32>} : memref<288x1024xbf16, #tpu.memory_space<vmem>>, vector<32x1024xbf16>,
    %c0_5 = arith.constant 0 : index
    %c2 = arith.constant 2 : index
    %4 = vector.load %arg1[%c0_5, %c2] : memref<32x1280xbf16, #tpu.memory_space<vmem>>, vector<32x1024xbf16>
    %c64 = arith.constant 64 : index
    %c0_6 = arith.constant 0 : index
    %5 = vector.load %arg8[%c64, %c0_6] : memref<288x1024xbf16, #tpu.memory_space<vmem>>, vector<32x1024xbf16>
    tpu.vector_store %arg8[%c64, %c0_6], %4 {strides = array<i32>} : memref<288x1024xbf16, #tpu.memory_space<vmem>>, vector<32x1024xbf16>,
    %c0_7 = arith.constant 0 : index
    %c18 = arith.constant 18 : index
    %6 = vector.load %arg1[%c0_7, %c18] : memref<32x1280xbf16, #tpu.memory_space<vmem>>, vector<32x1024xbf16>
    %c96 = arith.constant 96 : index
    %c0_8 = arith.constant 0 : index
    %7 = vector.load %arg8[%c96, %c0_8] : memref<288x1024xbf16, #tpu.memory_space<vmem>>, vector<32x1024xbf16>
    tpu.vector_store %arg8[%c96, %c0_8], %6 {strides = array<i32>} : memref<288x1024xbf16, #tpu.memory_space<vmem>>, vector<32x1024xbf16>,
    %c0_9 = arith.constant 0 : index
    %c19 = arith.constant 19 : index
    %8 = vector.load %arg1[%c0_9, %c19] : memref<32x1280xbf16, #tpu.memory_space<vmem>>, vector<32x1024xbf16>
    %c128 = arith.constant 128 : index
    %c0_10 = arith.constant 0 : index
    %9 = vector.load %arg8[%c128, %c0_10] : memref<288x1024xbf16, #tpu.memory_space<vmem>>, vector<32x1024xbf16>
    tpu.vector_store %arg8[%c128, %c0_10], %8 {strides = array<i32>} : memref<288x1024xbf16, #tpu.memory_space<vmem>>, vector<32x1024xbf16>,
    %c0_11 = arith.constant 0 : index
    %c20 = arith.constant 20 : index
    %10 = vector.load %arg1[%c0_11, %c20] : memref<32x1280xbf16, #tpu.memory_space<vmem>>, vector<32x1024xbf16>
    %c160 = arith.constant 160 : index
    %c0_12 = arith.constant 0 : index
    %11 = vector.load %arg8[%c160, %c0_12] : memref<288x1024xbf16, #tpu.memory_space<vmem>>, vector<32x1024xbf16>
    tpu.vector_store %arg8[%c160, %c0_12], %10 {strides = array<i32>} : memref<288x1024xbf16, #tpu.memory_space<vmem>>, vector<32x1024xbf16>,
    %c0_13 = arith.constant 0 : index
    %c36 = arith.constant 36 : index
    %12 = vector.load %arg1[%c0_13, %c36] : memref<32x1280xbf16, #tpu.memory_space<vmem>>, vector<32x1024xbf16>
    %c192 = arith.constant 192 : index
    %c0_14 = arith.constant 0 : index
    %13 = vector.load %arg8[%c192, %c0_14] : memref<288x1024xbf16, #tpu.memory_space<vmem>>, vector<32x1024xbf16>
    tpu.vector_store %arg8[%c192, %c0_14], %12 {strides = array<i32>} : memref<288x1024xbf16, #tpu.memory_space<vmem>>, vector<32x1024xbf16>,
    %c0_15 = arith.constant 0 : index
    %c37 = arith.constant 37 : index
    %14 = vector.load %arg1[%c0_15, %c37] : memref<32x1280xbf16, #tpu.memory_space<vmem>>, vector<32x1024xbf16>
    %c224 = arith.constant 224 : index
    %c0_16 = arith.constant 0 : index
    %15 = vector.load %arg8[%c224, %c0_16] : memref<288x1024xbf16, #tpu.memory_space<vmem>>, vector<32x1024xbf16>
    tpu.vector_store %arg8[%c224, %c0_16], %14 {strides = array<i32>} : memref<288x1024xbf16, #tpu.memory_space<vmem>>, vector<32x1024xbf16>,
    %c0_17 = arith.constant 0 : index
    %c38 = arith.constant 38 : index
    %16 = vector.load %arg1[%c0_17, %c38] : memref<32x1280xbf16, #tpu.memory_space<vmem>>, vector<32x1024xbf16>
    %c256 = arith.constant 256 : index
    %c0_18 = arith.constant 0 : index
    %17 = vector.load %arg8[%c256, %c0_18] : memref<288x1024xbf16, #tpu.memory_space<vmem>>, vector<32x1024xbf16>
    tpu.vector_store %arg8[%c256, %c0_18], %16 {strides = array<i32>} : memref<288x1024xbf16, #tpu.memory_space<vmem>>, vector<32x1024xbf16>,
    %c0_19 = arith.constant 0 : index
    %c0_20 = arith.constant 0 : index
    %18 = vector.load %arg2[%c0_19, %c0_20] : memref<8x288xbf16, #tpu.memory_space<vmem>>, vector<8x288xbf16>
    %c0_21 = arith.constant 0 : index
    %c0_22 = arith.constant 0 : index
    %19 = vector.load %arg8[%c0_21, %c0_22] : memref<288x1024xbf16, #tpu.memory_space<vmem>>, vector<288x1024xbf16>
    %cst = arith.constant dense<0.000000e+00> : vector<8x1024xf32>
    %20 = tpu.matmul %18, %19, %cst {dimension_numbers = #tpu.dot_dimension_numbers<[1], [0], [0], [1], [0, 0, 1, 1], [], []>} : vector<8x288xbf16>, vector<288x1024xbf16>, vector<8x1024xf32> -> vector<8x1024xf32>
    %c0_23 = arith.constant 0 : index
    %c0_24 = arith.constant 0 : index
    %21 = vector.load %arg3[%c0_23, %c0_24] : memref<8x1xf32, #tpu.memory_space<vmem>>, vector<8x1xf32>
    %22 = vector.broadcast %21 : vector<8x1xf32> to vector<8x1024xf32>
    %23 = arith.addf %20, %22 : vector<8x1024xf32>
    %cst_25 = arith.constant 0.000000e+00 : f32
    %24 = vector.broadcast %cst_25 : f32 to vector<8x1024xf32>
    %25 = arith.maximumf %23, %24 : vector<8x1024xf32>
    %c0_26 = arith.constant 0 : index
    %c0_27 = arith.constant 0 : index
    %26 = vector.load %arg6[%c0_26, %c0_27] : memref<1x1280xf32, #tpu.memory_space<vmem>>, vector<1x1024xf32>
    %27 = vector.broadcast %26 : vector<1x1024xf32> to vector<8x1024xf32>
    %28 = arith.mulf %25, %27 : vector<8x1024xf32>
    %cst_28 = arith.constant 0.000000e+00 : f32
    %29 = vector.broadcast %cst_28 : f32 to vector<8x128xf32>
    %cst_29 = arith.constant 0.000000e+00 : f32
    %30 = vector.broadcast %cst_29 : f32 to vector<8x128xf32>
    %c0_30 = arith.constant 0 : index
    %c0_31 = arith.constant 0 : index
    %31 = vector.load %arg9[%c0_30, %c0_31] : memref<8x1280xf32, #tpu.memory_space<vmem>>, vector<8x128xf32>
    tpu.vector_store %arg9[%c0_30, %c0_31], %29 {strides = array<i32>} : memref<8x1280xf32, #tpu.memory_space<vmem>>, vector<8x128xf32>,
    %32 = vector.extract_strided_slice %28 {offsets = [0, 0], sizes = [8, 384], strides = [1, 1]} : vector<8x1024xf32> to vector<8x384xf32>
    %c0_32 = arith.constant 0 : index
    %c128_33 = arith.constant 128 : index
    %33 = vector.load %arg9[%c0_32, %c128_33] : memref<8x1280xf32, #tpu.memory_space<vmem>>, vector<8x384xf32>
    tpu.vector_store %arg9[%c0_32, %c128_33], %32 {strides = array<i32>} : memref<8x1280xf32, #tpu.memory_space<vmem>>, vector<8x384xf32>,
    %c0_34 = arith.constant 0 : index
    %c512 = arith.constant 512 : index
    %34 = vector.load %arg9[%c0_34, %c512] : memref<8x1280xf32, #tpu.memory_space<vmem>>, vector<8x128xf32>
    tpu.vector_store %arg9[%c0_34, %c512], %30 {strides = array<i32>} : memref<8x1280xf32, #tpu.memory_space<vmem>>, vector<8x128xf32>,
    %c0_35 = arith.constant 0 : index
    %c640 = arith.constant 640 : index
    %35 = vector.load %arg9[%c0_35, %c640] : memref<8x1280xf32, #tpu.memory_space<vmem>>, vector<8x128xf32>
    tpu.vector_store %arg9[%c0_35, %c640], %29 {strides = array<i32>} : memref<8x1280xf32, #tpu.memory_space<vmem>>, vector<8x128xf32>,
    %36 = vector.extract_strided_slice %28 {offsets = [0, 640], sizes = [8, 384], strides = [1, 1]} : vector<8x1024xf32> to vector<8x384xf32>
    %c0_36 = arith.constant 0 : index
    %c768 = arith.constant 768 : index
    %37 = vector.load %arg9[%c0_36, %c768] : memref<8x1280xf32, #tpu.memory_space<vmem>>, vector<8x384xf32>
    tpu.vector_store %arg9[%c0_36, %c768], %36 {strides = array<i32>} : memref<8x1280xf32, #tpu.memory_space<vmem>>, vector<8x384xf32>,
    %c0_37 = arith.constant 0 : index
    %c1152 = arith.constant 1152 : index
    %38 = vector.load %arg9[%c0_37, %c1152] : memref<8x1280xf32, #tpu.memory_space<vmem>>, vector<8x128xf32>
    tpu.vector_store %arg9[%c0_37, %c1152], %30 {strides = array<i32>} : memref<8x1280xf32, #tpu.memory_space<vmem>>, vector<8x128xf32>,
    %cst_38 = arith.constant 0.000000e+00 : f32
    %39 = vector.broadcast %cst_38 : f32 to vector<8x1024xf32>
    %c0_39 = arith.constant 0 : index
    %c0_40 = arith.constant 0 : index
    %c0_41 = arith.constant 0 : index
    %40 = vector.load %arg4[%c0_39, %c0_40, %c0_41] : memref<9x8x1xf32, #tpu.memory_space<vmem>>, vector<1x8x1xf32>
    %41 = vector.shape_cast %40 : vector<1x8x1xf32> to vector<8x1xf32>
    %c0_42 = arith.constant 0 : index
    %c109 = arith.constant 109 : index
    %42 = vector.load %arg9[%c0_42, %c109] : memref<8x1280xf32, #tpu.memory_space<vmem>>, vector<8x1024xf32>
    %43 = vector.broadcast %41 : vector<8x1xf32> to vector<8x1024xf32>
    %44 = arith.mulf %43, %42 : vector<8x1024xf32>
    %45 = arith.addf %39, %44 : vector<8x1024xf32>
    %c1_43 = arith.constant 1 : index
    %c0_44 = arith.constant 0 : index
    %c0_45 = arith.constant 0 : index
    %46 = vector.load %arg4[%c1_43, %c0_44, %c0_45] : memref<9x8x1xf32, #tpu.memory_space<vmem>>, vector<1x8x1xf32>
    %47 = vector.shape_cast %46 : vector<1x8x1xf32> to vector<8x1xf32>
    %c0_46 = arith.constant 0 : index
    %c110 = arith.constant 110 : index
    %48 = vector.load %arg9[%c0_46, %c110] : memref<8x1280xf32, #tpu.memory_space<vmem>>, vector<8x1024xf32>
    %49 = vector.broadcast %47 : vector<8x1xf32> to vector<8x1024xf32>
    %50 = arith.mulf %49, %48 : vector<8x1024xf32>
    %51 = arith.addf %45, %50 : vector<8x1024xf32>
    %c2_47 = arith.constant 2 : index
    %c0_48 = arith.constant 0 : index
    %c0_49 = arith.constant 0 : index
    %52 = vector.load %arg4[%c2_47, %c0_48, %c0_49] : memref<9x8x1xf32, #tpu.memory_space<vmem>>, vector<1x8x1xf32>
    %53 = vector.shape_cast %52 : vector<1x8x1xf32> to vector<8x1xf32>
    %c0_50 = arith.constant 0 : index
    %c111 = arith.constant 111 : index
    %54 = vector.load %arg9[%c0_50, %c111] : memref<8x1280xf32, #tpu.memory_space<vmem>>, vector<8x1024xf32>
    %55 = vector.broadcast %53 : vector<8x1xf32> to vector<8x1024xf32>
    %56 = arith.mulf %55, %54 : vector<8x1024xf32>
    %57 = arith.addf %51, %56 : vector<8x1024xf32>
    %c3 = arith.constant 3 : index
    %c0_51 = arith.constant 0 : index
    %c0_52 = arith.constant 0 : index
    %58 = vector.load %arg4[%c3, %c0_51, %c0_52] : memref<9x8x1xf32, #tpu.memory_space<vmem>>, vector<1x8x1xf32>
    %59 = vector.shape_cast %58 : vector<1x8x1xf32> to vector<8x1xf32>
    %c0_53 = arith.constant 0 : index
    %c127 = arith.constant 127 : index
    %60 = vector.load %arg9[%c0_53, %c127] : memref<8x1280xf32, #tpu.memory_space<vmem>>, vector<8x1024xf32>
    %61 = vector.broadcast %59 : vector<8x1xf32> to vector<8x1024xf32>
    %62 = arith.mulf %61, %60 : vector<8x1024xf32>
    %63 = arith.addf %57, %62 : vector<8x1024xf32>
    %c4 = arith.constant 4 : index
    %c0_54 = arith.constant 0 : index
    %c0_55 = arith.constant 0 : index
    %64 = vector.load %arg4[%c4, %c0_54, %c0_55] : memref<9x8x1xf32, #tpu.memory_space<vmem>>, vector<1x8x1xf32>
    %65 = vector.shape_cast %64 : vector<1x8x1xf32> to vector<8x1xf32>
    %c0_56 = arith.constant 0 : index
    %c128_57 = arith.constant 128 : index
    %66 = vector.load %arg9[%c0_56, %c128_57] : memref<8x1280xf32, #tpu.memory_space<vmem>>, vector<8x1024xf32>
    %67 = vector.broadcast %65 : vector<8x1xf32> to vector<8x1024xf32>
    %68 = arith.mulf %67, %66 : vector<8x1024xf32>
    %69 = arith.addf %63, %68 : vector<8x1024xf32>
    %c5 = arith.constant 5 : index
    %c0_58 = arith.constant 0 : index
    %c0_59 = arith.constant 0 : index
    %70 = vector.load %arg4[%c5, %c0_58, %c0_59] : memref<9x8x1xf32, #tpu.memory_space<vmem>>, vector<1x8x1xf32>
    %71 = vector.shape_cast %70 : vector<1x8x1xf32> to vector<8x1xf32>
    %c0_60 = arith.constant 0 : index
    %c129 = arith.constant 129 : index
    %72 = vector.load %arg9[%c0_60, %c129] : memref<8x1280xf32, #tpu.memory_space<vmem>>, vector<8x1024xf32>
    %73 = vector.broadcast %71 : vector<8x1xf32> to vector<8x1024xf32>
    %74 = arith.mulf %73, %72 : vector<8x1024xf32>
    %75 = arith.addf %69, %74 : vector<8x1024xf32>
    %c6 = arith.constant 6 : index
    %c0_61 = arith.constant 0 : index
    %c0_62 = arith.constant 0 : index
    %76 = vector.load %arg4[%c6, %c0_61, %c0_62] : memref<9x8x1xf32, #tpu.memory_space<vmem>>, vector<1x8x1xf32>
    %77 = vector.shape_cast %76 : vector<1x8x1xf32> to vector<8x1xf32>
    %c0_63 = arith.constant 0 : index
    %c145 = arith.constant 145 : index
    %78 = vector.load %arg9[%c0_63, %c145] : memref<8x1280xf32, #tpu.memory_space<vmem>>, vector<8x1024xf32>
    %79 = vector.broadcast %77 : vector<8x1xf32> to vector<8x1024xf32>
    %80 = arith.mulf %79, %78 : vector<8x1024xf32>
    %81 = arith.addf %75, %80 : vector<8x1024xf32>
    %c7 = arith.constant 7 : index
    %c0_64 = arith.constant 0 : index
    %c0_65 = arith.constant 0 : index
    %82 = vector.load %arg4[%c7, %c0_64, %c0_65] : memref<9x8x1xf32, #tpu.memory_space<vmem>>, vector<1x8x1xf32>
    %83 = vector.shape_cast %82 : vector<1x8x1xf32> to vector<8x1xf32>
    %c0_66 = arith.constant 0 : index
    %c146 = arith.constant 146 : index
    %84 = vector.load %arg9[%c0_66, %c146] : memref<8x1280xf32, #tpu.memory_space<vmem>>, vector<8x1024xf32>
    %85 = vector.broadcast %83 : vector<8x1xf32> to vector<8x1024xf32>
    %86 = arith.mulf %85, %84 : vector<8x1024xf32>
    %87 = arith.addf %81, %86 : vector<8x1024xf32>
    %c8 = arith.constant 8 : index
    %c0_67 = arith.constant 0 : index
    %c0_68 = arith.constant 0 : index
    %88 = vector.load %arg4[%c8, %c0_67, %c0_68] : memref<9x8x1xf32, #tpu.memory_space<vmem>>, vector<1x8x1xf32>
    %89 = vector.shape_cast %88 : vector<1x8x1xf32> to vector<8x1xf32>
    %c0_69 = arith.constant 0 : index
    %c147 = arith.constant 147 : index
    %90 = vector.load %arg9[%c0_69, %c147] : memref<8x1280xf32, #tpu.memory_space<vmem>>, vector<8x1024xf32>
    %91 = vector.broadcast %89 : vector<8x1xf32> to vector<8x1024xf32>
    %92 = arith.mulf %91, %90 : vector<8x1024xf32>
    %93 = arith.addf %87, %92 : vector<8x1024xf32>
    %cst_70 = arith.constant dense<0.000000e+00> : vector<1024xf32>
    %94 = vector.multi_reduction <add>, %93, %cst_70 [0] : vector<8x1024xf32> to vector<1024xf32>
    %95 = vector.shape_cast %94 : vector<1024xf32> to vector<1x1024xf32>
    %c0_71 = arith.constant 0 : index
    %c0_72 = arith.constant 0 : index
    %96 = vector.load %arg5[%c0_71, %c0_72] : memref<1x1xf32, #tpu.memory_space<vmem>>, vector<1x1xf32>
    %97 = vector.broadcast %96 : vector<1x1xf32> to vector<1x1024xf32>
    %98 = arith.addf %95, %97 : vector<1x1024xf32>
    %cst_73 = arith.constant 0.000000e+00 : f32
    %99 = vector.broadcast %cst_73 : f32 to vector<1x1024xf32>
    %100 = arith.maximumf %98, %99 : vector<1x1024xf32>
    %101 = vector.extract_strided_slice %100 {offsets = [0, 0], sizes = [1, 384], strides = [1, 1]} : vector<1x1024xf32> to vector<1x384xf32>
    %c0_74 = arith.constant 0 : index
    %c0_75 = arith.constant 0 : index
    %c0_76 = arith.constant 0 : index
    %102 = vector.load %arg7[%c0_74, %c0_75, %c0_76] : memref<1x1x768xf32, #tpu.memory_space<vmem>>, vector<1x1x384xf32>
    %103 = vector.shape_cast %102 : vector<1x1x384xf32> to vector<1x384xf32>
    %104 = vector.shape_cast %101 : vector<1x384xf32> to vector<1x1x384xf32>
    tpu.vector_store %arg7[%c0_74, %c0_75, %c0_76], %104 {strides = array<i32>} : memref<1x1x768xf32, #tpu.memory_space<vmem>>, vector<1x1x384xf32>,
    %105 = vector.extract_strided_slice %100 {offsets = [0, 640], sizes = [1, 384], strides = [1, 1]} : vector<1x1024xf32> to vector<1x384xf32>
    %c0_77 = arith.constant 0 : index
    %c0_78 = arith.constant 0 : index
    %c384 = arith.constant 384 : index
    %106 = vector.load %arg7[%c0_77, %c0_78, %c384] : memref<1x1x768xf32, #tpu.memory_space<vmem>>, vector<1x1x384xf32>
    %107 = vector.shape_cast %106 : vector<1x1x384xf32> to vector<1x384xf32>
    %108 = vector.shape_cast %105 : vector<1x384xf32> to vector<1x1x384xf32>
    tpu.vector_store %arg7[%c0_77, %c0_78, %c384], %108 {strides = array<i32>} : memref<1x1x768xf32, #tpu.memory_space<vmem>>, vector<1x1x384xf32>,
    return
  }
  func.func @transform_0(%arg0: i32) -> (i32, i32) {
    %c0_i32 = arith.constant 0 : i32
    %c0_i32_0 = arith.constant 0 : i32
    return %c0_i32, %arg0 : i32, i32
  }
  func.func @transform_1(%arg0: i32) -> (i32, i32) {
    %c0_i32 = arith.constant 0 : i32
    %c0_i32_0 = arith.constant 0 : i32
    %c0_i32_1 = arith.constant 0 : i32
    return %c0_i32, %c0_i32_0 : i32, i32
  }
  func.func @transform_2(%arg0: i32) -> (i32, i32) {
    %c0_i32 = arith.constant 0 : i32
    %c0_i32_0 = arith.constant 0 : i32
    %c0_i32_1 = arith.constant 0 : i32
    return %c0_i32, %c0_i32_0 : i32, i32
  }
  func.func @transform_3(%arg0: i32) -> (i32, i32, i32) {
    %c0_i32 = arith.constant 0 : i32
    %c0_i32_0 = arith.constant 0 : i32
    %c0_i32_1 = arith.constant 0 : i32
    %c0_i32_2 = arith.constant 0 : i32
    return %c0_i32, %c0_i32_0, %c0_i32_1 : i32, i32, i32
  }
  func.func @transform_4(%arg0: i32) -> (i32, i32) {
    %c0_i32 = arith.constant 0 : i32
    %c0_i32_0 = arith.constant 0 : i32
    %c0_i32_1 = arith.constant 0 : i32
    return %c0_i32, %c0_i32_0 : i32, i32
  }
  func.func @transform_5(%arg0: i32) -> (i32, i32) {
    %c0_i32 = arith.constant 0 : i32
    %c0_i32_0 = arith.constant 0 : i32
    %c0_i32_1 = arith.constant 0 : i32
    return %c0_i32, %c0_i32_0 : i32, i32
  }
  func.func @transform_6(%arg0: i32) -> (i32, i32, i32) {
    %c0_i32 = arith.constant 0 : i32
    %c0_i32_0 = arith.constant 0 : i32
    %c0_i32_1 = arith.constant 0 : i32
    return %arg0, %c0_i32, %c0_i32_0 : i32, i32, i32
  }
}

</mosaic_0001>

<llo_original>
// kernel: tpu_custom_call.1
$region0: #{tpu_custom_call.1}
  #allocation0 [shape = 'u32[]', space=smem, size = 0x4, offset = 0x4, fixed_abs, tag = 'smem constant byte address 0x4 - core index']
  #allocation1 [shape = 'u32[144,128]{1,0:T(1,128)}', space=vmem, size = 0x12000, scoped, tag = 'internal scratch']
  #allocation2 [shape = 'bf16[288,1024]{1,0:T(16,128)(2,1)}', space=vmem, size = 0x90000, scoped, tag = 'scratch operand']
  #allocation3 [shape = 'f32[8,1280]{1,0:T(8,128)}', space=vmem, size = 0xa000, scoped, tag = 'scratch operand']
  #allocation4 [shape = 'f32[1,1]{1,0:T(1,128)S(1)}', space=vmem, size = 0x200, scoped, tag = 'scoped memory for tpu_custom_call.1']
  %s0 = inlined_call_operand.hbm [shape: bf16[32,1280], index: 0, kind: input, shape index: {}]
  %s1 = inlined_call_operand.vmem [shape: bf16[8,288], index: 1, kind: input, shape index: {}]
  %s2 = inlined_call_operand.vmem [shape: f32[8,1], index: 2, kind: input, shape index: {}]
  %s3 = inlined_call_operand.vmem [shape: f32[9,8,1], index: 3, kind: input, shape index: {}]
  %s4 = inlined_call_operand.<no memory space> [shape: f32[1,1], index: 4, kind: input, shape index: {}]
  %s5 = inlined_call_operand.vmem [shape: f32[1,1280], index: 5, kind: input, shape index: {}]
  %s6 = inlined_call_operand.hbm [shape: f32[1,1,768], index: 6, kind: output, shape index: {}]
  %s7 = sld [smem:[#allocation0]]
  $region38: #{tpu_custom_call.1} parent=0
    _
  %s9 = ssub.s32 1, %s7
  %s10 = scalar_select 0, %s9, %s7
  %v11 = vstv %s4
  %12 = vst [vmem:[#allocation4] sm:$0x1] %v11
  $region1: #{tpu_custom_call.1} parent=0
    #allocation5 [shape = 'u8[81920]{0}', space=vmem, size = 0x14000, scoped, tag = 'input window, operand 0, single buffered']
    #allocation6 [shape = 's32[1]{0}', space=sflag, size = 0x4, scoped, tag = 'scoped memory for tpu_custom_call.1']
    #allocation7 [shape = 's32[1]{0}', space=sflag, size = 0x4, scoped, tag = 'scoped memory for tpu_custom_call.1']
    #allocation8 [shape = 'u8[3072]{0}', space=vmem, size = 0xc00, scoped, tag = 'output window, operand 0, single buffered']
    %13 = vsyncpa [#allocation6], 0
    %14 = vsyncpa [#allocation7], 0
    // Predicated region
    $region2: #{tpu_custom_call.1} parent=1 // pred_check
      _
    $region3: #{tpu_custom_call.1} parent=1 // pred_check_branch
      %16 = sbr.rel (0) target = $region5
    $region4: #{tpu_custom_call.1} parent=1 // pred_region
      %s18 = ssub.s32 2560, 2560
      %19 = vsyncadd [#allocation6], %s18
      %s20 = sshll.u32 [#allocation5], 4
      %s21 = int_to_ptr.vmem [resolvable:$true] %s20
      %26 = dma.hbm_to_vmem [thread:$0]  %s0, 2560, %s21, [#allocation6], 640, 640, 40
    $region5: #{tpu_custom_call.1} parent=1 // pred_fallthru
      _
    // Predicated region
    $region6: #{tpu_custom_call.1} parent=1 // pred_check
      _
    $region7: #{tpu_custom_call.1} parent=1 // pred_check_branch
      %28 = sbr.rel (0) target = $region9
    $region8: #{tpu_custom_call.1} parent=1 // pred_region
      _
    $region9: #{tpu_custom_call.1} parent=1 // pred_fallthru
      _
    // Predicated region
    $region10: #{tpu_custom_call.1} parent=1 // pred_check
      _
    $region11: #{tpu_custom_call.1} parent=1 // pred_check_branch
      %30 = sbr.rel (0) target = $region13
    $region12: #{tpu_custom_call.1} parent=1 // pred_region
      _
    $region13: #{tpu_custom_call.1} parent=1 // pred_fallthru
      _
    // Predicated region
    $region14: #{tpu_custom_call.1} parent=1 // pred_check
      _
    $region15: #{tpu_custom_call.1} parent=1 // pred_check_branch
      %32 = sbr.rel (0) target = $region17
    $region16: #{tpu_custom_call.1} parent=1 // pred_region
      _
    $region17: #{tpu_custom_call.1} parent=1 // pred_fallthru
      _
    // Predicated region
    $region18: #{tpu_custom_call.1} parent=1 // pred_check
      _
    $region19: #{tpu_custom_call.1} parent=1 // pred_check_branch
      %34 = sbr.rel (0) target = $region21
    $region20: #{tpu_custom_call.1} parent=1 // pred_region
      _
    $region21: #{tpu_custom_call.1} parent=1 // pred_fallthru
      _
    // Predicated region
    $region22: #{tpu_custom_call.1} parent=1 // pred_check
      _
    $region23: #{tpu_custom_call.1} parent=1 // pred_check_branch
      %36 = sbr.rel (0) target = $region25
    $region24: #{tpu_custom_call.1} parent=1 // pred_region
      _
    $region25: #{tpu_custom_call.1} parent=1 // pred_fallthru
      _
    // Predicated region
    $region26: #{tpu_custom_call.1} parent=1 // pred_check
      _
    $region27: #{tpu_custom_call.1} parent=1 // pred_check_branch
      %38 = sbr.rel (0) target = $region29
    $region28: #{tpu_custom_call.1} parent=1 // pred_region
      %39 = dma.done [#allocation6], 2560
    $region29: #{tpu_custom_call.1} parent=1 // pred_fallthru
      _
    %v41 = vld [vmem:[#allocation5] sm:$0xff]
    %v42 = vld [vmem:[#allocation5 + $0x8] sm:$0xff]
    %v43 = vld [vmem:[#allocation5 + $0x10] sm:$0xff]
    %v44 = vld [vmem:[#allocation5 + $0x18] sm:$0xff]
    %v45 = vld [vmem:[#allocation5 + $0x28] sm:$0xff]
    %v46 = vld [vmem:[#allocation5 + $0x30] sm:$0xff]
    %v47 = vld [vmem:[#allocation5 + $0x38] sm:$0xff]
    %v48 = vld [vmem:[#allocation5 + $0x40] sm:$0xff]
    %v49 = vld [vmem:[#allocation5 + $0x50] sm:$0xff]
    %v50 = vld [vmem:[#allocation5 + $0x58] sm:$0xff]
    %v51 = vld [vmem:[#allocation5 + $0x60] sm:$0xff]
    %v52 = vld [vmem:[#allocation5 + $0x68] sm:$0xff]
    %v53 = vld [vmem:[#allocation5 + $0x78] sm:$0xff]
    %v54 = vld [vmem:[#allocation5 + $0x80] sm:$0xff]
    %v55 = vld [vmem:[#allocation5 + $0x88] sm:$0xff]
    %v56 = vld [vmem:[#allocation5 + $0x90] sm:$0xff]
    %v73 = vunpack.c.l.b16 %v41
    %v74 = vunpack.c.h.b16 %v41
    %v75 = vunpack.c.l.b16 %v42
    %v76 = vunpack.c.h.b16 %v42
    %v77 = vunpack.c.l.b16 %v43
    %v78 = vunpack.c.h.b16 %v43
    %v79 = vunpack.c.l.b16 %v44
    %v80 = vunpack.c.h.b16 %v44
    %v81 = vunpack.c.l.b16 %v45
    %v82 = vunpack.c.h.b16 %v45
    %v83 = vunpack.c.l.b16 %v46
    %v84 = vunpack.c.h.b16 %v46
    %v85 = vunpack.c.l.b16 %v47
    %v86 = vunpack.c.h.b16 %v47
    %v87 = vunpack.c.l.b16 %v48
    %v88 = vunpack.c.h.b16 %v48
    %v89 = vunpack.c.l.b16 %v49
    %v90 = vunpack.c.h.b16 %v49
    %v91 = vunpack.c.l.b16 %v50
    %v92 = vunpack.c.h.b16 %v50
    %v93 = vunpack.c.l.b16 %v51
    %v94 = vunpack.c.h.b16 %v51
    %v95 = vunpack.c.l.b16 %v52
    %v96 = vunpack.c.h.b16 %v52
    %v97 = vunpack.c.l.b16 %v53
    %v98 = vunpack.c.h.b16 %v53
    %v99 = vunpack.c.l.b16 %v54
    %v100 = vunpack.c.h.b16 %v54
    %v101 = vunpack.c.l.b16 %v55
    %v102 = vunpack.c.h.b16 %v55
    %v103 = vunpack.c.l.b16 %v56
    %v104 = vunpack.c.h.b16 %v56
    %v105 = vpack.c.b16 %v81, %v73
    %v106 = vpack.c.b16 %v82, %v74
    %v107 = vpack.c.b16 %v83, %v75
    %v108 = vpack.c.b16 %v84, %v76
    %v109 = vpack.c.b16 %v85, %v77
    %v110 = vpack.c.b16 %v86, %v78
    %v111 = vpack.c.b16 %v87, %v79
    %v112 = vpack.c.b16 %v88, %v80
    %v113 = vpack.c.b16 %v97, %v89
    %v114 = vpack.c.b16 %v98, %v90
    %v115 = vpack.c.b16 %v99, %v91
    %v116 = vpack.c.b16 %v100, %v92
    %v117 = vpack.c.b16 %v101, %v93
    %v118 = vpack.c.b16 %v102, %v94
    %v119 = vpack.c.b16 %v103, %v95
    %v120 = vpack.c.b16 %v104, %v96
    %137 = vst [vmem:[#allocation2] sm:$0xff] %v105
    %138 = vst [vmem:[#allocation2 + $0x8] sm:$0xff] %v106
    %139 = vst [vmem:[#allocation2 + $0x10] sm:$0xff] %v107
    %140 = vst [vmem:[#allocation2 + $0x18] sm:$0xff] %v108
    %141 = vst [vmem:[#allocation2 + $0x20] sm:$0xff] %v109
    %142 = vst [vmem:[#allocation2 + $0x28] sm:$0xff] %v110
    %143 = vst [vmem:[#allocation2 + $0x30] sm:$0xff] %v111
    %144 = vst [vmem:[#allocation2 + $0x38] sm:$0xff] %v112
    %145 = vst [vmem:[#allocation2 + $0x40] sm:$0xff] %v113
    %146 = vst [vmem:[#allocation2 + $0x48] sm:$0xff] %v114
    %147 = vst [vmem:[#allocation2 + $0x50] sm:$0xff] %v115
    %148 = vst [vmem:[#allocation2 + $0x58] sm:$0xff] %v116
    %149 = vst [vmem:[#allocation2 + $0x60] sm:$0xff] %v117
    %150 = vst [vmem:[#allocation2 + $0x68] sm:$0xff] %v118
    %151 = vst [vmem:[#allocation2 + $0x70] sm:$0xff] %v119
    %152 = vst [vmem:[#allocation2 + $0x78] sm:$0xff] %v120
    %v153 = vld [vmem:[#allocation5] sm:$0xff]
    %v154 = vld [vmem:[#allocation5 + $0x8] sm:$0xff]
    %v155 = vld [vmem:[#allocation5 + $0x10] sm:$0xff]
    %v156 = vld [vmem:[#allocation5 + $0x18] sm:$0xff]
    %v157 = vld [vmem:[#allocation5 + $0x20] sm:$0xf]
    %v158 = vld [vmem:[#allocation5 + $0x28] sm:$0xff]
    %v159 = vld [vmem:[#allocation5 + $0x30] sm:$0xff]
    %v160 = vld [vmem:[#allocation5 + $0x38] sm:$0xff]
    %v161 = vld [vmem:[#allocation5 + $0x40] sm:$0xff]
    %v162 = vld [vmem:[#allocation5 + $0x48] sm:$0xf]
    %v163 = vld [vmem:[#allocation5 + $0x50] sm:$0xff]
    %v164 = vld [vmem:[#allocation5 + $0x58] sm:$0xff]
    %v165 = vld [vmem:[#allocation5 + $0x60] sm:$0xff]
    %v166 = vld [vmem:[#allocation5 + $0x68] sm:$0xff]
    %v167 = vld [vmem:[#allocation5 + $0x70] sm:$0xf]
    %v168 = vld [vmem:[#allocation5 + $0x78] sm:$0xff]
    %v169 = vld [vmem:[#allocation5 + $0x80] sm:$0xff]
    %v170 = vld [vmem:[#allocation5 + $0x88] sm:$0xff]
    %v171 = vld [vmem:[#allocation5 + $0x90] sm:$0xff]
    %v172 = vld [vmem:[#allocation5 + $0x98] sm:$0xf]
    %v193 = vunpack.c.l.b16 %v153
    %v194 = vunpack.c.h.b16 %v153
    %v195 = vunpack.c.l.b16 %v154
    %v196 = vunpack.c.h.b16 %v154
    %v197 = vunpack.c.l.b16 %v155
    %v198 = vunpack.c.h.b16 %v155
    %v199 = vunpack.c.l.b16 %v156
    %v200 = vunpack.c.h.b16 %v156
    %v201 = vunpack.c.l.b16 %v157
    %v202 = vunpack.c.l.b16 %v158
    %v203 = vunpack.c.h.b16 %v158
    %v204 = vunpack.c.l.b16 %v159
    %v205 = vunpack.c.h.b16 %v159
    %v206 = vunpack.c.l.b16 %v160
    %v207 = vunpack.c.h.b16 %v160
    %v208 = vunpack.c.l.b16 %v161
    %v209 = vunpack.c.h.b16 %v161
    %v210 = vunpack.c.l.b16 %v162
    %v211 = vunpack.c.l.b16 %v163
    %v212 = vunpack.c.h.b16 %v163
    %v213 = vunpack.c.l.b16 %v164
    %v214 = vunpack.c.h.b16 %v164
    %v215 = vunpack.c.l.b16 %v165
    %v216 = vunpack.c.h.b16 %v165
    %v217 = vunpack.c.l.b16 %v166
    %v218 = vunpack.c.h.b16 %v166
    %v219 = vunpack.c.l.b16 %v167
    %v220 = vunpack.c.l.b16 %v168
    %v221 = vunpack.c.h.b16 %v168
    %v222 = vunpack.c.l.b16 %v169
    %v223 = vunpack.c.h.b16 %v169
    %v224 = vunpack.c.l.b16 %v170
    %v225 = vunpack.c.h.b16 %v170
    %v226 = vunpack.c.l.b16 %v171
    %v227 = vunpack.c.h.b16 %v171
    %v228 = vunpack.c.l.b16 %v172
    %v229 = vpack.c.b16 %v202, %v193
    %v230 = vpack.c.b16 %v203, %v194
    %v231 = vpack.c.b16 %v204, %v195
    %v232 = vpack.c.b16 %v205, %v196
    %v233 = vpack.c.b16 %v206, %v197
    %v234 = vpack.c.b16 %v207, %v198
    %v235 = vpack.c.b16 %v208, %v199
    %v236 = vpack.c.b16 %v209, %v200
    %v237 = vpack.c.b16 %v210, %v201
    %v238 = vpack.c.b16 %v220, %v211
    %v239 = vpack.c.b16 %v221, %v212
    %v240 = vpack.c.b16 %v222, %v213
    %v241 = vpack.c.b16 %v223, %v214
    %v242 = vpack.c.b16 %v224, %v215
    %v243 = vpack.c.b16 %v225, %v216
    %v244 = vpack.c.b16 %v226, %v217
    %v245 = vpack.c.b16 %v227, %v218
    %v246 = vpack.c.b16 %v228, %v219
    %247 = vrot.lane.b32.xlu0 %v229, 127
    %v248 = vpop.permute.xlu0 %247
    %249 = vrot.lane.b32.xlu0 %v230, 127
    %v250 = vpop.permute.xlu0 %249
    %251 = vrot.lane.b32.xlu0 %v231, 127
    %v252 = vpop.permute.xlu0 %251
    %253 = vrot.lane.b32.xlu0 %v232, 127
    %v254 = vpop.permute.xlu0 %253
    %255 = vrot.lane.b32.xlu0 %v233, 127
    %v256 = vpop.permute.xlu0 %255
    %257 = vrot.lane.b32.xlu0 %v234, 127
    %v258 = vpop.permute.xlu0 %257
    %259 = vrot.lane.b32.xlu0 %v235, 127
    %v260 = vpop.permute.xlu0 %259
    %261 = vrot.lane.b32.xlu0 %v236, 127
    %v262 = vpop.permute.xlu0 %261
    %263 = vrot.lane.b32.xlu0 %v237, 127
    %v264 = vpop.permute.xlu0 %263
    %265 = vrot.lane.b32.xlu0 %v238, 127
    %v266 = vpop.permute.xlu0 %265
    %267 = vrot.lane.b32.xlu0 %v239, 127
    %v268 = vpop.permute.xlu0 %267
    %269 = vrot.lane.b32.xlu0 %v240, 127
    %v270 = vpop.permute.xlu0 %269
    %271 = vrot.lane.b32.xlu0 %v241, 127
    %v272 = vpop.permute.xlu0 %271
    %273 = vrot.lane.b32.xlu0 %v242, 127
    %v274 = vpop.permute.xlu0 %273
    %275 = vrot.lane.b32.xlu0 %v243, 127
    %v276 = vpop.permute.xlu0 %275
    %277 = vrot.lane.b32.xlu0 %v244, 127
    %v278 = vpop.permute.xlu0 %277
    %279 = vrot.lane.b32.xlu0 %v245, 127
    %v280 = vpop.permute.xlu0 %279
    %281 = vrot.lane.b32.xlu0 %v246, 127
    %v282 = vpop.permute.xlu0 %281
    %vm283 = vcmask 1039360
    %v284 = vsel %vm283, %v248, %v250
    %v285 = vsel %vm283, %v250, %v252
    %v286 = vsel %vm283, %v252, %v254
    %v287 = vsel %vm283, %v254, %v256
    %v288 = vsel %vm283, %v256, %v258
    %v289 = vsel %vm283, %v258, %v260
    %v290 = vsel %vm283, %v260, %v262
    %v291 = vsel %vm283, %v262, %v264
    %v292 = vsel %vm283, %v266, %v268
    %v293 = vsel %vm283, %v268, %v270
    %v294 = vsel %vm283, %v270, %v272
    %v295 = vsel %vm283, %v272, %v274
    %v296 = vsel %vm283, %v274, %v276
    %v297 = vsel %vm283, %v276, %v278
    %v298 = vsel %vm283, %v278, %v280
    %v299 = vsel %vm283, %v280, %v282
    %316 = vst [vmem:[#allocation2 + $0x80] sm:$0xff] %v284
    %317 = vst [vmem:[#allocation2 + $0x88] sm:$0xff] %v285
    %318 = vst [vmem:[#allocation2 + $0x90] sm:$0xff] %v286
    %319 = vst [vmem:[#allocation2 + $0x98] sm:$0xff] %v287
    %320 = vst [vmem:[#allocation2 + $0xa0] sm:$0xff] %v288
    %321 = vst [vmem:[#allocation2 + $0xa8] sm:$0xff] %v289
    %322 = vst [vmem:[#allocation2 + $0xb0] sm:$0xff] %v290
    %323 = vst [vmem:[#allocation2 + $0xb8] sm:$0xff] %v291
    %324 = vst [vmem:[#allocation2 + $0xc0] sm:$0xff] %v292
    %325 = vst [vmem:[#allocation2 + $0xc8] sm:$0xff] %v293
    %326 = vst [vmem:[#allocation2 + $0xd0] sm:$0xff] %v294
    %327 = vst [vmem:[#allocation2 + $0xd8] sm:$0xff] %v295
    %328 = vst [vmem:[#allocation2 + $0xe0] sm:$0xff] %v296
    %329 = vst [vmem:[#allocation2 + $0xe8] sm:$0xff] %v297
    %330 = vst [vmem:[#allocation2 + $0xf0] sm:$0xff] %v298
    %331 = vst [vmem:[#allocation2 + $0xf8] sm:$0xff] %v299
    %v332 = vld [vmem:[#allocation5] sm:$0xff]
    %v333 = vld [vmem:[#allocation5 + $0x8] sm:$0xff]
    %v334 = vld [vmem:[#allocation5 + $0x10] sm:$0xff]
    %v335 = vld [vmem:[#allocation5 + $0x18] sm:$0xff]
    %v336 = vld [vmem:[#allocation5 + $0x20] sm:$0xf]
    %v337 = vld [vmem:[#allocation5 + $0x28] sm:$0xff]
    %v338 = vld [vmem:[#allocation5 + $0x30] sm:$0xff]
    %v339 = vld [vmem:[#allocation5 + $0x38] sm:$0xff]
    %v340 = vld [vmem:[#allocation5 + $0x40] sm:$0xff]
    %v341 = vld [vmem:[#allocation5 + $0x48] sm:$0xf]
    %v342 = vld [vmem:[#allocation5 + $0x50] sm:$0xff]
    %v343 = vld [vmem:[#allocation5 + $0x58] sm:$0xff]
    %v344 = vld [vmem:[#allocation5 + $0x60] sm:$0xff]
    %v345 = vld [vmem:[#allocation5 + $0x68] sm:$0xff]
    %v346 = vld [vmem:[#allocation5 + $0x70] sm:$0xf]
    %v347 = vld [vmem:[#allocation5 + $0x78] sm:$0xff]
    %v348 = vld [vmem:[#allocation5 + $0x80] sm:$0xff]
    %v349 = vld [vmem:[#allocation5 + $0x88] sm:$0xff]
    %v350 = vld [vmem:[#allocation5 + $0x90] sm:$0xff]
    %v351 = vld [vmem:[#allocation5 + $0x98] sm:$0xf]
    %v372 = vunpack.c.l.b16 %v332
    %v373 = vunpack.c.h.b16 %v332
    %v374 = vunpack.c.l.b16 %v333
    %v375 = vunpack.c.h.b16 %v333
    %v376 = vunpack.c.l.b16 %v334
    %v377 = vunpack.c.h.b16 %v334
    %v378 = vunpack.c.l.b16 %v335
    %v379 = vunpack.c.h.b16 %v335
    %v380 = vunpack.c.l.b16 %v336
    %v381 = vunpack.c.l.b16 %v337
    %v382 = vunpack.c.h.b16 %v337
    %v383 = vunpack.c.l.b16 %v338
    %v384 = vunpack.c.h.b16 %v338
    %v385 = vunpack.c.l.b16 %v339
    %v386 = vunpack.c.h.b16 %v339
    %v387 = vunpack.c.l.b16 %v340
    %v388 = vunpack.c.h.b16 %v340
    %v389 = vunpack.c.l.b16 %v341
    %v390 = vunpack.c.l.b16 %v342
    %v391 = vunpack.c.h.b16 %v342
    %v392 = vunpack.c.l.b16 %v343
    %v393 = vunpack.c.h.b16 %v343
    %v394 = vunpack.c.l.b16 %v344
    %v395 = vunpack.c.h.b16 %v344
    %v396 = vunpack.c.l.b16 %v345
    %v397 = vunpack.c.h.b16 %v345
    %v398 = vunpack.c.l.b16 %v346
    %v399 = vunpack.c.l.b16 %v347
    %v400 = vunpack.c.h.b16 %v347
    %v401 = vunpack.c.l.b16 %v348
    %v402 = vunpack.c.h.b16 %v348
    %v403 = vunpack.c.l.b16 %v349
    %v404 = vunpack.c.h.b16 %v349
    %v405 = vunpack.c.l.b16 %v350
    %v406 = vunpack.c.h.b16 %v350
    %v407 = vunpack.c.l.b16 %v351
    %v408 = vpack.c.b16 %v381, %v372
    %v409 = vpack.c.b16 %v382, %v373
    %v410 = vpack.c.b16 %v383, %v374
    %v411 = vpack.c.b16 %v384, %v375
    %v412 = vpack.c.b16 %v385, %v376
    %v413 = vpack.c.b16 %v386, %v377
    %v414 = vpack.c.b16 %v387, %v378
    %v415 = vpack.c.b16 %v388, %v379
    %v416 = vpack.c.b16 %v389, %v380
    %v417 = vpack.c.b16 %v399, %v390
    %v418 = vpack.c.b16 %v400, %v391
    %v419 = vpack.c.b16 %v401, %v392
    %v420 = vpack.c.b16 %v402, %v393
    %v421 = vpack.c.b16 %v403, %v394
    %v422 = vpack.c.b16 %v404, %v395
    %v423 = vpack.c.b16 %v405, %v396
    %v424 = vpack.c.b16 %v406, %v397
    %v425 = vpack.c.b16 %v407, %v398
    %426 = vrot.lane.b32.xlu0 %v408, 126
    %v427 = vpop.permute.xlu0 %426
    %428 = vrot.lane.b32.xlu0 %v409, 126
    %v429 = vpop.permute.xlu0 %428
    %430 = vrot.lane.b32.xlu0 %v410, 126
    %v431 = vpop.permute.xlu0 %430
    %432 = vrot.lane.b32.xlu0 %v411, 126
    %v433 = vpop.permute.xlu0 %432
    %434 = vrot.lane.b32.xlu0 %v412, 126
    %v435 = vpop.permute.xlu0 %434
    %436 = vrot.lane.b32.xlu0 %v413, 126
    %v437 = vpop.permute.xlu0 %436
    %438 = vrot.lane.b32.xlu0 %v414, 126
    %v439 = vpop.permute.xlu0 %438
    %440 = vrot.lane.b32.xlu0 %v415, 126
    %v441 = vpop.permute.xlu0 %440
    %442 = vrot.lane.b32.xlu0 %v416, 126
    %v443 = vpop.permute.xlu0 %442
    %444 = vrot.lane.b32.xlu0 %v417, 126
    %v445 = vpop.permute.xlu0 %444
    %446 = vrot.lane.b32.xlu0 %v418, 126
    %v447 = vpop.permute.xlu0 %446
    %448 = vrot.lane.b32.xlu0 %v419, 126
    %v449 = vpop.permute.xlu0 %448
    %450 = vrot.lane.b32.xlu0 %v420, 126
    %v451 = vpop.permute.xlu0 %450
    %452 = vrot.lane.b32.xlu0 %v421, 126
    %v453 = vpop.permute.xlu0 %452
    %454 = vrot.lane.b32.xlu0 %v422, 126
    %v455 = vpop.permute.xlu0 %454
    %456 = vrot.lane.b32.xlu0 %v423, 126
    %v457 = vpop.permute.xlu0 %456
    %458 = vrot.lane.b32.xlu0 %v424, 126
    %v459 = vpop.permute.xlu0 %458
    %460 = vrot.lane.b32.xlu0 %v425, 126
    %v461 = vpop.permute.xlu0 %460
    %vm462 = vcmask 1031168
    %v463 = vsel %vm462, %v427, %v429
    %v464 = vsel %vm462, %v429, %v431
    %v465 = vsel %vm462, %v431, %v433
    %v466 = vsel %vm462, %v433, %v435
    %v467 = vsel %vm462, %v435, %v437
    %v468 = vsel %vm462, %v437, %v439
    %v469 = vsel %vm462, %v439, %v441
    %v470 = vsel %vm462, %v441, %v443
    %v471 = vsel %vm462, %v445, %v447
    %v472 = vsel %vm462, %v447, %v449
    %v473 = vsel %vm462, %v449, %v451
    %v474 = vsel %vm462, %v451, %v453
    %v475 = vsel %vm462, %v453, %v455
    %v476 = vsel %vm462, %v455, %v457
    %v477 = vsel %vm462, %v457, %v459
    %v478 = vsel %vm462, %v459, %v461
    %495 = vst [vmem:[#allocation2 + $0x100] sm:$0xff] %v463
    %496 = vst [vmem:[#allocation2 + $0x108] sm:$0xff] %v464
    %497 = vst [vmem:[#allocation2 + $0x110] sm:$0xff] %v465
    %498 = vst [vmem:[#allocation2 + $0x118] sm:$0xff] %v466
    %499 = vst [vmem:[#allocation2 + $0x120] sm:$0xff] %v467
    %500 = vst [vmem:[#allocation2 + $0x128] sm:$0xff] %v468
    %501 = vst [vmem:[#allocation2 + $0x130] sm:$0xff] %v469
    %502 = vst [vmem:[#allocation2 + $0x138] sm:$0xff] %v470
    %503 = vst [vmem:[#allocation2 + $0x140] sm:$0xff] %v471
    %504 = vst [vmem:[#allocation2 + $0x148] sm:$0xff] %v472
    %505 = vst [vmem:[#allocation2 + $0x150] sm:$0xff] %v473
    %506 = vst [vmem:[#allocation2 + $0x158] sm:$0xff] %v474
    %507 = vst [vmem:[#allocation2 + $0x160] sm:$0xff] %v475
    %508 = vst [vmem:[#allocation2 + $0x168] sm:$0xff] %v476
    %509 = vst [vmem:[#allocation2 + $0x170] sm:$0xff] %v477
    %510 = vst [vmem:[#allocation2 + $0x178] sm:$0xff] %v478
    %v511 = vld [vmem:[#allocation5] sm:$0xff]
    %v512 = vld [vmem:[#allocation5 + $0x8] sm:$0xff]
    %v513 = vld [vmem:[#allocation5 + $0x10] sm:$0xff]
    %v514 = vld [vmem:[#allocation5 + $0x18] sm:$0xff]
    %v515 = vld [vmem:[#allocation5 + $0x20] sm:$0xf]
    %v516 = vld [vmem:[#allocation5 + $0x28] sm:$0xff]
    %v517 = vld [vmem:[#allocation5 + $0x30] sm:$0xff]
    %v518 = vld [vmem:[#allocation5 + $0x38] sm:$0xff]
    %v519 = vld [vmem:[#allocation5 + $0x40] sm:$0xff]
    %v520 = vld [vmem:[#allocation5 + $0x48] sm:$0xf]
    %v521 = vld [vmem:[#allocation5 + $0x50] sm:$0xff]
    %v522 = vld [vmem:[#allocation5 + $0x58] sm:$0xff]
    %v523 = vld [vmem:[#allocation5 + $0x60] sm:$0xff]
    %v524 = vld [vmem:[#allocation5 + $0x68] sm:$0xff]
    %v525 = vld [vmem:[#allocation5 + $0x70] sm:$0xf]
    %v526 = vld [vmem:[#allocation5 + $0x78] sm:$0xff]
    %v527 = vld [vmem:[#allocation5 + $0x80] sm:$0xff]
    %v528 = vld [vmem:[#allocation5 + $0x88] sm:$0xff]
    %v529 = vld [vmem:[#allocation5 + $0x90] sm:$0xff]
    %v530 = vld [vmem:[#allocation5 + $0x98] sm:$0xf]
    %v551 = vunpack.c.l.b16 %v511
    %v552 = vunpack.c.h.b16 %v511
    %v553 = vunpack.c.l.b16 %v512
    %v554 = vunpack.c.h.b16 %v512
    %v555 = vunpack.c.l.b16 %v513
    %v556 = vunpack.c.h.b16 %v513
    %v557 = vunpack.c.l.b16 %v514
    %v558 = vunpack.c.h.b16 %v514
    %v559 = vunpack.c.l.b16 %v515
    %v560 = vunpack.c.l.b16 %v516
    %v561 = vunpack.c.h.b16 %v516
    %v562 = vunpack.c.l.b16 %v517
    %v563 = vunpack.c.h.b16 %v517
    %v564 = vunpack.c.l.b16 %v518
    %v565 = vunpack.c.h.b16 %v518
    %v566 = vunpack.c.l.b16 %v519
    %v567 = vunpack.c.h.b16 %v519
    %v568 = vunpack.c.l.b16 %v520
    %v569 = vunpack.c.l.b16 %v521
    %v570 = vunpack.c.h.b16 %v521
    %v571 = vunpack.c.l.b16 %v522
    %v572 = vunpack.c.h.b16 %v522
    %v573 = vunpack.c.l.b16 %v523
    %v574 = vunpack.c.h.b16 %v523
    %v575 = vunpack.c.l.b16 %v524
    %v576 = vunpack.c.h.b16 %v524
    %v577 = vunpack.c.l.b16 %v525
    %v578 = vunpack.c.l.b16 %v526
    %v579 = vunpack.c.h.b16 %v526
    %v580 = vunpack.c.l.b16 %v527
    %v581 = vunpack.c.h.b16 %v527
    %v582 = vunpack.c.l.b16 %v528
    %v583 = vunpack.c.h.b16 %v528
    %v584 = vunpack.c.l.b16 %v529
    %v585 = vunpack.c.h.b16 %v529
    %v586 = vunpack.c.l.b16 %v530
    %v587 = vpack.c.b16 %v560, %v551
    %v588 = vpack.c.b16 %v561, %v552
    %v589 = vpack.c.b16 %v562, %v553
    %v590 = vpack.c.b16 %v563, %v554
    %v591 = vpack.c.b16 %v564, %v555
    %v592 = vpack.c.b16 %v565, %v556
    %v593 = vpack.c.b16 %v566, %v557
    %v594 = vpack.c.b16 %v567, %v558
    %v595 = vpack.c.b16 %v568, %v559
    %v596 = vpack.c.b16 %v578, %v569
    %v597 = vpack.c.b16 %v579, %v570
    %v598 = vpack.c.b16 %v580, %v571
    %v599 = vpack.c.b16 %v581, %v572
    %v600 = vpack.c.b16 %v582, %v573
    %v601 = vpack.c.b16 %v583, %v574
    %v602 = vpack.c.b16 %v584, %v575
    %v603 = vpack.c.b16 %v585, %v576
    %v604 = vpack.c.b16 %v586, %v577
    %605 = vrot.lane.b32.xlu0 %v587, 110
    %v606 = vpop.permute.xlu0 %605
    %607 = vrot.lane.b32.xlu0 %v588, 110
    %v608 = vpop.permute.xlu0 %607
    %609 = vrot.lane.b32.xlu0 %v589, 110
    %v610 = vpop.permute.xlu0 %609
    %611 = vrot.lane.b32.xlu0 %v590, 110
    %v612 = vpop.permute.xlu0 %611
    %613 = vrot.lane.b32.xlu0 %v591, 110
    %v614 = vpop.permute.xlu0 %613
    %615 = vrot.lane.b32.xlu0 %v592, 110
    %v616 = vpop.permute.xlu0 %615
    %617 = vrot.lane.b32.xlu0 %v593, 110
    %v618 = vpop.permute.xlu0 %617
    %619 = vrot.lane.b32.xlu0 %v594, 110
    %v620 = vpop.permute.xlu0 %619
    %621 = vrot.lane.b32.xlu0 %v595, 110
    %v622 = vpop.permute.xlu0 %621
    %623 = vrot.lane.b32.xlu0 %v596, 110
    %v624 = vpop.permute.xlu0 %623
    %625 = vrot.lane.b32.xlu0 %v597, 110
    %v626 = vpop.permute.xlu0 %625
    %627 = vrot.lane.b32.xlu0 %v598, 110
    %v628 = vpop.permute.xlu0 %627
    %629 = vrot.lane.b32.xlu0 %v599, 110
    %v630 = vpop.permute.xlu0 %629
    %631 = vrot.lane.b32.xlu0 %v600, 110
    %v632 = vpop.permute.xlu0 %631
    %633 = vrot.lane.b32.xlu0 %v601, 110
    %v634 = vpop.permute.xlu0 %633
    %635 = vrot.lane.b32.xlu0 %v602, 110
    %v636 = vpop.permute.xlu0 %635
    %637 = vrot.lane.b32.xlu0 %v603, 110
    %v638 = vpop.permute.xlu0 %637
    %639 = vrot.lane.b32.xlu0 %v604, 110
    %v640 = vpop.permute.xlu0 %639
    %vm641 = vcmask 900096
    %v642 = vsel %vm641, %v606, %v608
    %v643 = vsel %vm641, %v608, %v610
    %v644 = vsel %vm641, %v610, %v612
    %v645 = vsel %vm641, %v612, %v614
    %v646 = vsel %vm641, %v614, %v616
    %v647 = vsel %vm641, %v616, %v618
    %v648 = vsel %vm641, %v618, %v620
    %v649 = vsel %vm641, %v620, %v622
    %v650 = vsel %vm641, %v624, %v626
    %v651 = vsel %vm641, %v626, %v628
    %v652 = vsel %vm641, %v628, %v630
    %v653 = vsel %vm641, %v630, %v632
    %v654 = vsel %vm641, %v632, %v634
    %v655 = vsel %vm641, %v634, %v636
    %v656 = vsel %vm641, %v636, %v638
    %v657 = vsel %vm641, %v638, %v640
    %674 = vst [vmem:[#allocation2 + $0x180] sm:$0xff] %v642
    %675 = vst [vmem:[#allocation2 + $0x188] sm:$0xff] %v643
    %676 = vst [vmem:[#allocation2 + $0x190] sm:$0xff] %v644
    %677 = vst [vmem:[#allocation2 + $0x198] sm:$0xff] %v645
    %678 = vst [vmem:[#allocation2 + $0x1a0] sm:$0xff] %v646
    %679 = vst [vmem:[#allocation2 + $0x1a8] sm:$0xff] %v647
    %680 = vst [vmem:[#allocation2 + $0x1b0] sm:$0xff] %v648
    %681 = vst [vmem:[#allocation2 + $0x1b8] sm:$0xff] %v649
    %682 = vst [vmem:[#allocation2 + $0x1c0] sm:$0xff] %v650
    %683 = vst [vmem:[#allocation2 + $0x1c8] sm:$0xff] %v651
    %684 = vst [vmem:[#allocation2 + $0x1d0] sm:$0xff] %v652
    %685 = vst [vmem:[#allocation2 + $0x1d8] sm:$0xff] %v653
    %686 = vst [vmem:[#allocation2 + $0x1e0] sm:$0xff] %v654
    %687 = vst [vmem:[#allocation2 + $0x1e8] sm:$0xff] %v655
    %688 = vst [vmem:[#allocation2 + $0x1f0] sm:$0xff] %v656
    %689 = vst [vmem:[#allocation2 + $0x1f8] sm:$0xff] %v657
    %v690 = vld [vmem:[#allocation5] sm:$0xff]
    %v691 = vld [vmem:[#allocation5 + $0x8] sm:$0xff]
    %v692 = vld [vmem:[#allocation5 + $0x10] sm:$0xff]
    %v693 = vld [vmem:[#allocation5 + $0x18] sm:$0xff]
    %v694 = vld [vmem:[#allocation5 + $0x20] sm:$0xf]
    %v695 = vld [vmem:[#allocation5 + $0x28] sm:$0xff]
    %v696 = vld [vmem:[#allocation5 + $0x30] sm:$0xff]
    %v697 = vld [vmem:[#allocation5 + $0x38] sm:$0xff]
    %v698 = vld [vmem:[#allocation5 + $0x40] sm:$0xff]
    %v699 = vld [vmem:[#allocation5 + $0x48] sm:$0xf]
    %v700 = vld [vmem:[#allocation5 + $0x50] sm:$0xff]
    %v701 = vld [vmem:[#allocation5 + $0x58] sm:$0xff]
    %v702 = vld [vmem:[#allocation5 + $0x60] sm:$0xff]
    %v703 = vld [vmem:[#allocation5 + $0x68] sm:$0xff]
    %v704 = vld [vmem:[#allocation5 + $0x70] sm:$0xf]
    %v705 = vld [vmem:[#allocation5 + $0x78] sm:$0xff]
    %v706 = vld [vmem:[#allocation5 + $0x80] sm:$0xff]
    %v707 = vld [vmem:[#allocation5 + $0x88] sm:$0xff]
    %v708 = vld [vmem:[#allocation5 + $0x90] sm:$0xff]
    %v709 = vld [vmem:[#allocation5 + $0x98] sm:$0xf]
    %v730 = vunpack.c.l.b16 %v690
    %v731 = vunpack.c.h.b16 %v690
    %v732 = vunpack.c.l.b16 %v691
    %v733 = vunpack.c.h.b16 %v691
    %v734 = vunpack.c.l.b16 %v692
    %v735 = vunpack.c.h.b16 %v692
    %v736 = vunpack.c.l.b16 %v693
    %v737 = vunpack.c.h.b16 %v693
    %v738 = vunpack.c.l.b16 %v694
    %v739 = vunpack.c.l.b16 %v695
    %v740 = vunpack.c.h.b16 %v695
    %v741 = vunpack.c.l.b16 %v696
    %v742 = vunpack.c.h.b16 %v696
    %v743 = vunpack.c.l.b16 %v697
    %v744 = vunpack.c.h.b16 %v697
    %v745 = vunpack.c.l.b16 %v698
    %v746 = vunpack.c.h.b16 %v698
    %v747 = vunpack.c.l.b16 %v699
    %v748 = vunpack.c.l.b16 %v700
    %v749 = vunpack.c.h.b16 %v700
    %v750 = vunpack.c.l.b16 %v701
    %v751 = vunpack.c.h.b16 %v701
    %v752 = vunpack.c.l.b16 %v702
    %v753 = vunpack.c.h.b16 %v702
    %v754 = vunpack.c.l.b16 %v703
    %v755 = vunpack.c.h.b16 %v703
    %v756 = vunpack.c.l.b16 %v704
    %v757 = vunpack.c.l.b16 %v705
    %v758 = vunpack.c.h.b16 %v705
    %v759 = vunpack.c.l.b16 %v706
    %v760 = vunpack.c.h.b16 %v706
    %v761 = vunpack.c.l.b16 %v707
    %v762 = vunpack.c.h.b16 %v707
    %v763 = vunpack.c.l.b16 %v708
    %v764 = vunpack.c.h.b16 %v708
    %v765 = vunpack.c.l.b16 %v709
    %v766 = vpack.c.b16 %v739, %v730
    %v767 = vpack.c.b16 %v740, %v731
    %v768 = vpack.c.b16 %v741, %v732
    %v769 = vpack.c.b16 %v742, %v733
    %v770 = vpack.c.b16 %v743, %v734
    %v771 = vpack.c.b16 %v744, %v735
    %v772 = vpack.c.b16 %v745, %v736
    %v773 = vpack.c.b16 %v746, %v737
    %v774 = vpack.c.b16 %v747, %v738
    %v775 = vpack.c.b16 %v757, %v748
    %v776 = vpack.c.b16 %v758, %v749
    %v777 = vpack.c.b16 %v759, %v750
    %v778 = vpack.c.b16 %v760, %v751
    %v779 = vpack.c.b16 %v761, %v752
    %v780 = vpack.c.b16 %v762, %v753
    %v781 = vpack.c.b16 %v763, %v754
    %v782 = vpack.c.b16 %v764, %v755
    %v783 = vpack.c.b16 %v765, %v756
    %784 = vrot.lane.b32.xlu0 %v766, 109
    %v785 = vpop.permute.xlu0 %784
    %786 = vrot.lane.b32.xlu0 %v767, 109
    %v787 = vpop.permute.xlu0 %786
    %788 = vrot.lane.b32.xlu0 %v768, 109
    %v789 = vpop.permute.xlu0 %788
    %790 = vrot.lane.b32.xlu0 %v769, 109
    %v791 = vpop.permute.xlu0 %790
    %792 = vrot.lane.b32.xlu0 %v770, 109
    %v793 = vpop.permute.xlu0 %792
    %794 = vrot.lane.b32.xlu0 %v771, 109
    %v795 = vpop.permute.xlu0 %794
    %796 = vrot.lane.b32.xlu0 %v772, 109
    %v797 = vpop.permute.xlu0 %796
    %798 = vrot.lane.b32.xlu0 %v773, 109
    %v799 = vpop.permute.xlu0 %798
    %800 = vrot.lane.b32.xlu0 %v774, 109
    %v801 = vpop.permute.xlu0 %800
    %802 = vrot.lane.b32.xlu0 %v775, 109
    %v803 = vpop.permute.xlu0 %802
    %804 = vrot.lane.b32.xlu0 %v776, 109
    %v805 = vpop.permute.xlu0 %804
    %806 = vrot.lane.b32.xlu0 %v777, 109
    %v807 = vpop.permute.xlu0 %806
    %808 = vrot.lane.b32.xlu0 %v778, 109
    %v809 = vpop.permute.xlu0 %808
    %810 = vrot.lane.b32.xlu0 %v779, 109
    %v811 = vpop.permute.xlu0 %810
    %812 = vrot.lane.b32.xlu0 %v780, 109
    %v813 = vpop.permute.xlu0 %812
    %814 = vrot.lane.b32.xlu0 %v781, 109
    %v815 = vpop.permute.xlu0 %814
    %816 = vrot.lane.b32.xlu0 %v782, 109
    %v817 = vpop.permute.xlu0 %816
    %818 = vrot.lane.b32.xlu0 %v783, 109
    %v819 = vpop.permute.xlu0 %818
    %vm820 = vcmask 891904
    %v821 = vsel %vm820, %v785, %v787
    %v822 = vsel %vm820, %v787, %v789
    %v823 = vsel %vm820, %v789, %v791
    %v824 = vsel %vm820, %v791, %v793
    %v825 = vsel %vm820, %v793, %v795
    %v826 = vsel %vm820, %v795, %v797
    %v827 = vsel %vm820, %v797, %v799
    %v828 = vsel %vm820, %v799, %v801
    %v829 = vsel %vm820, %v803, %v805
    %v830 = vsel %vm820, %v805, %v807
    %v831 = vsel %vm820, %v807, %v809
    %v832 = vsel %vm820, %v809, %v811
    %v833 = vsel %vm820, %v811, %v813
    %v834 = vsel %vm820, %v813, %v815
    %v835 = vsel %vm820, %v815, %v817
    %v836 = vsel %vm820, %v817, %v819
    %853 = vst [vmem:[#allocation2 + $0x200] sm:$0xff] %v821
    %854 = vst [vmem:[#allocation2 + $0x208] sm:$0xff] %v822
    %855 = vst [vmem:[#allocation2 + $0x210] sm:$0xff] %v823
    %856 = vst [vmem:[#allocation2 + $0x218] sm:$0xff] %v824
    %857 = vst [vmem:[#allocation2 + $0x220] sm:$0xff] %v825
    %858 = vst [vmem:[#allocation2 + $0x228] sm:$0xff] %v826
    %859 = vst [vmem:[#allocation2 + $0x230] sm:$0xff] %v827
    %860 = vst [vmem:[#allocation2 + $0x238] sm:$0xff] %v828
    %861 = vst [vmem:[#allocation2 + $0x240] sm:$0xff] %v829
    %862 = vst [vmem:[#allocation2 + $0x248] sm:$0xff] %v830
    %863 = vst [vmem:[#allocation2 + $0x250] sm:$0xff] %v831
    %864 = vst [vmem:[#allocation2 + $0x258] sm:$0xff] %v832
    %865 = vst [vmem:[#allocation2 + $0x260] sm:$0xff] %v833
    %866 = vst [vmem:[#allocation2 + $0x268] sm:$0xff] %v834
    %867 = vst [vmem:[#allocation2 + $0x270] sm:$0xff] %v835
    %868 = vst [vmem:[#allocation2 + $0x278] sm:$0xff] %v836
    %v869 = vld [vmem:[#allocation5] sm:$0xff]
    %v870 = vld [vmem:[#allocation5 + $0x8] sm:$0xff]
    %v871 = vld [vmem:[#allocation5 + $0x10] sm:$0xff]
    %v872 = vld [vmem:[#allocation5 + $0x18] sm:$0xff]
    %v873 = vld [vmem:[#allocation5 + $0x20] sm:$0xf]
    %v874 = vld [vmem:[#allocation5 + $0x28] sm:$0xff]
    %v875 = vld [vmem:[#allocation5 + $0x30] sm:$0xff]
    %v876 = vld [vmem:[#allocation5 + $0x38] sm:$0xff]
    %v877 = vld [vmem:[#allocation5 + $0x40] sm:$0xff]
    %v878 = vld [vmem:[#allocation5 + $0x48] sm:$0xf]
    %v879 = vld [vmem:[#allocation5 + $0x50] sm:$0xff]
    %v880 = vld [vmem:[#allocation5 + $0x58] sm:$0xff]
    %v881 = vld [vmem:[#allocation5 + $0x60] sm:$0xff]
    %v882 = vld [vmem:[#allocation5 + $0x68] sm:$0xff]
    %v883 = vld [vmem:[#allocation5 + $0x70] sm:$0xf]
    %v884 = vld [vmem:[#allocation5 + $0x78] sm:$0xff]
    %v885 = vld [vmem:[#allocation5 + $0x80] sm:$0xff]
    %v886 = vld [vmem:[#allocation5 + $0x88] sm:$0xff]
    %v887 = vld [vmem:[#allocation5 + $0x90] sm:$0xff]
    %v888 = vld [vmem:[#allocation5 + $0x98] sm:$0xf]
    %v909 = vunpack.c.l.b16 %v869
    %v910 = vunpack.c.h.b16 %v869
    %v911 = vunpack.c.l.b16 %v870
    %v912 = vunpack.c.h.b16 %v870
    %v913 = vunpack.c.l.b16 %v871
    %v914 = vunpack.c.h.b16 %v871
    %v915 = vunpack.c.l.b16 %v872
    %v916 = vunpack.c.h.b16 %v872
    %v917 = vunpack.c.l.b16 %v873
    %v918 = vunpack.c.l.b16 %v874
    %v919 = vunpack.c.h.b16 %v874
    %v920 = vunpack.c.l.b16 %v875
    %v921 = vunpack.c.h.b16 %v875
    %v922 = vunpack.c.l.b16 %v876
    %v923 = vunpack.c.h.b16 %v876
    %v924 = vunpack.c.l.b16 %v877
    %v925 = vunpack.c.h.b16 %v877
    %v926 = vunpack.c.l.b16 %v878
    %v927 = vunpack.c.l.b16 %v879
    %v928 = vunpack.c.h.b16 %v879
    %v929 = vunpack.c.l.b16 %v880
    %v930 = vunpack.c.h.b16 %v880
    %v931 = vunpack.c.l.b16 %v881
    %v932 = vunpack.c.h.b16 %v881
    %v933 = vunpack.c.l.b16 %v882
    %v934 = vunpack.c.h.b16 %v882
    %v935 = vunpack.c.l.b16 %v883
    %v936 = vunpack.c.l.b16 %v884
    %v937 = vunpack.c.h.b16 %v884
    %v938 = vunpack.c.l.b16 %v885
    %v939 = vunpack.c.h.b16 %v885
    %v940 = vunpack.c.l.b16 %v886
    %v941 = vunpack.c.h.b16 %v886
    %v942 = vunpack.c.l.b16 %v887
    %v943 = vunpack.c.h.b16 %v887
    %v944 = vunpack.c.l.b16 %v888
    %v945 = vpack.c.b16 %v918, %v909
    %v946 = vpack.c.b16 %v919, %v910
    %v947 = vpack.c.b16 %v920, %v911
    %v948 = vpack.c.b16 %v921, %v912
    %v949 = vpack.c.b16 %v922, %v913
    %v950 = vpack.c.b16 %v923, %v914
    %v951 = vpack.c.b16 %v924, %v915
    %v952 = vpack.c.b16 %v925, %v916
    %v953 = vpack.c.b16 %v926, %v917
    %v954 = vpack.c.b16 %v936, %v927
    %v955 = vpack.c.b16 %v937, %v928
    %v956 = vpack.c.b16 %v938, %v929
    %v957 = vpack.c.b16 %v939, %v930
    %v958 = vpack.c.b16 %v940, %v931
    %v959 = vpack.c.b16 %v941, %v932
    %v960 = vpack.c.b16 %v942, %v933
    %v961 = vpack.c.b16 %v943, %v934
    %v962 = vpack.c.b16 %v944, %v935
    %963 = vrot.lane.b32.xlu0 %v945, 108
    %v964 = vpop.permute.xlu0 %963
    %965 = vrot.lane.b32.xlu0 %v946, 108
    %v966 = vpop.permute.xlu0 %965
    %967 = vrot.lane.b32.xlu0 %v947, 108
    %v968 = vpop.permute.xlu0 %967
    %969 = vrot.lane.b32.xlu0 %v948, 108
    %v970 = vpop.permute.xlu0 %969
    %971 = vrot.lane.b32.xlu0 %v949, 108
    %v972 = vpop.permute.xlu0 %971
    %973 = vrot.lane.b32.xlu0 %v950, 108
    %v974 = vpop.permute.xlu0 %973
    %975 = vrot.lane.b32.xlu0 %v951, 108
    %v976 = vpop.permute.xlu0 %975
    %977 = vrot.lane.b32.xlu0 %v952, 108
    %v978 = vpop.permute.xlu0 %977
    %979 = vrot.lane.b32.xlu0 %v953, 108
    %v980 = vpop.permute.xlu0 %979
    %981 = vrot.lane.b32.xlu0 %v954, 108
    %v982 = vpop.permute.xlu0 %981
    %983 = vrot.lane.b32.xlu0 %v955, 108
    %v984 = vpop.permute.xlu0 %983
    %985 = vrot.lane.b32.xlu0 %v956, 108
    %v986 = vpop.permute.xlu0 %985
    %987 = vrot.lane.b32.xlu0 %v957, 108
    %v988 = vpop.permute.xlu0 %987
    %989 = vrot.lane.b32.xlu0 %v958, 108
    %v990 = vpop.permute.xlu0 %989
    %991 = vrot.lane.b32.xlu0 %v959, 108
    %v992 = vpop.permute.xlu0 %991
    %993 = vrot.lane.b32.xlu0 %v960, 108
    %v994 = vpop.permute.xlu0 %993
    %995 = vrot.lane.b32.xlu0 %v961, 108
    %v996 = vpop.permute.xlu0 %995
    %997 = vrot.lane.b32.xlu0 %v962, 108
    %v998 = vpop.permute.xlu0 %997
    %vm999 = vcmask 883712
    %v1000 = vsel %vm999, %v964, %v966
    %v1001 = vsel %vm999, %v966, %v968
    %v1002 = vsel %vm999, %v968, %v970
    %v1003 = vsel %vm999, %v970, %v972
    %v1004 = vsel %vm999, %v972, %v974
    %v1005 = vsel %vm999, %v974, %v976
    %v1006 = vsel %vm999, %v976, %v978
    %v1007 = vsel %vm999, %v978, %v980
    %v1008 = vsel %vm999, %v982, %v984
    %v1009 = vsel %vm999, %v984, %v986
    %v1010 = vsel %vm999, %v986, %v988
    %v1011 = vsel %vm999, %v988, %v990
    %v1012 = vsel %vm999, %v990, %v992
    %v1013 = vsel %vm999, %v992, %v994
    %v1014 = vsel %vm999, %v994, %v996
    %v1015 = vsel %vm999, %v996, %v998
    %1032 = vst [vmem:[#allocation2 + $0x280] sm:$0xff] %v1000
    %1033 = vst [vmem:[#allocation2 + $0x288] sm:$0xff] %v1001
    %1034 = vst [vmem:[#allocation2 + $0x290] sm:$0xff] %v1002
    %1035 = vst [vmem:[#allocation2 + $0x298] sm:$0xff] %v1003
    %1036 = vst [vmem:[#allocation2 + $0x2a0] sm:$0xff] %v1004
    %1037 = vst [vmem:[#allocation2 + $0x2a8] sm:$0xff] %v1005
    %1038 = vst [vmem:[#allocation2 + $0x2b0] sm:$0xff] %v1006
    %1039 = vst [vmem:[#allocation2 + $0x2b8] sm:$0xff] %v1007
    %1040 = vst [vmem:[#allocation2 + $0x2c0] sm:$0xff] %v1008
    %1041 = vst [vmem:[#allocation2 + $0x2c8] sm:$0xff] %v1009
    %1042 = vst [vmem:[#allocation2 + $0x2d0] sm:$0xff] %v1010
    %1043 = vst [vmem:[#allocation2 + $0x2d8] sm:$0xff] %v1011
    %1044 = vst [vmem:[#allocation2 + $0x2e0] sm:$0xff] %v1012
    %1045 = vst [vmem:[#allocation2 + $0x2e8] sm:$0xff] %v1013
    %1046 = vst [vmem:[#allocation2 + $0x2f0] sm:$0xff] %v1014
    %1047 = vst [vmem:[#allocation2 + $0x2f8] sm:$0xff] %v1015
    %v1048 = vld [vmem:[#allocation5] sm:$0xff]
    %v1049 = vld [vmem:[#allocation5 + $0x8] sm:$0xff]
    %v1050 = vld [vmem:[#allocation5 + $0x10] sm:$0xff]
    %v1051 = vld [vmem:[#allocation5 + $0x18] sm:$0xff]
    %v1052 = vld [vmem:[#allocation5 + $0x20] sm:$0xf]
    %v1053 = vld [vmem:[#allocation5 + $0x28] sm:$0xff]
    %v1054 = vld [vmem:[#allocation5 + $0x30] sm:$0xff]
    %v1055 = vld [vmem:[#allocation5 + $0x38] sm:$0xff]
    %v1056 = vld [vmem:[#allocation5 + $0x40] sm:$0xff]
    %v1057 = vld [vmem:[#allocation5 + $0x48] sm:$0xf]
    %v1058 = vld [vmem:[#allocation5 + $0x50] sm:$0xff]
    %v1059 = vld [vmem:[#allocation5 + $0x58] sm:$0xff]
    %v1060 = vld [vmem:[#allocation5 + $0x60] sm:$0xff]
    %v1061 = vld [vmem:[#allocation5 + $0x68] sm:$0xff]
    %v1062 = vld [vmem:[#allocation5 + $0x70] sm:$0xf]
    %v1063 = vld [vmem:[#allocation5 + $0x78] sm:$0xff]
    %v1064 = vld [vmem:[#allocation5 + $0x80] sm:$0xff]
    %v1065 = vld [vmem:[#allocation5 + $0x88] sm:$0xff]
    %v1066 = vld [vmem:[#allocation5 + $0x90] sm:$0xff]
    %v1067 = vld [vmem:[#allocation5 + $0x98] sm:$0xf]
    %v1088 = vunpack.c.l.b16 %v1048
    %v1089 = vunpack.c.h.b16 %v1048
    %v1090 = vunpack.c.l.b16 %v1049
    %v1091 = vunpack.c.h.b16 %v1049
    %v1092 = vunpack.c.l.b16 %v1050
    %v1093 = vunpack.c.h.b16 %v1050
    %v1094 = vunpack.c.l.b16 %v1051
    %v1095 = vunpack.c.h.b16 %v1051
    %v1096 = vunpack.c.l.b16 %v1052
    %v1097 = vunpack.c.l.b16 %v1053
    %v1098 = vunpack.c.h.b16 %v1053
    %v1099 = vunpack.c.l.b16 %v1054
    %v1100 = vunpack.c.h.b16 %v1054
    %v1101 = vunpack.c.l.b16 %v1055
    %v1102 = vunpack.c.h.b16 %v1055
    %v1103 = vunpack.c.l.b16 %v1056
    %v1104 = vunpack.c.h.b16 %v1056
    %v1105 = vunpack.c.l.b16 %v1057
    %v1106 = vunpack.c.l.b16 %v1058
    %v1107 = vunpack.c.h.b16 %v1058
    %v1108 = vunpack.c.l.b16 %v1059
    %v1109 = vunpack.c.h.b16 %v1059
    %v1110 = vunpack.c.l.b16 %v1060
    %v1111 = vunpack.c.h.b16 %v1060
    %v1112 = vunpack.c.l.b16 %v1061
    %v1113 = vunpack.c.h.b16 %v1061
    %v1114 = vunpack.c.l.b16 %v1062
    %v1115 = vunpack.c.l.b16 %v1063
    %v1116 = vunpack.c.h.b16 %v1063
    %v1117 = vunpack.c.l.b16 %v1064
    %v1118 = vunpack.c.h.b16 %v1064
    %v1119 = vunpack.c.l.b16 %v1065
    %v1120 = vunpack.c.h.b16 %v1065
    %v1121 = vunpack.c.l.b16 %v1066
    %v1122 = vunpack.c.h.b16 %v1066
    %v1123 = vunpack.c.l.b16 %v1067
    %v1124 = vpack.c.b16 %v1097, %v1088
    %v1125 = vpack.c.b16 %v1098, %v1089
    %v1126 = vpack.c.b16 %v1099, %v1090
    %v1127 = vpack.c.b16 %v1100, %v1091
    %v1128 = vpack.c.b16 %v1101, %v1092
    %v1129 = vpack.c.b16 %v1102, %v1093
    %v1130 = vpack.c.b16 %v1103, %v1094
    %v1131 = vpack.c.b16 %v1104, %v1095
    %v1132 = vpack.c.b16 %v1105, %v1096
    %v1133 = vpack.c.b16 %v1115, %v1106
    %v1134 = vpack.c.b16 %v1116, %v1107
    %v1135 = vpack.c.b16 %v1117, %v1108
    %v1136 = vpack.c.b16 %v1118, %v1109
    %v1137 = vpack.c.b16 %v1119, %v1110
    %v1138 = vpack.c.b16 %v1120, %v1111
    %v1139 = vpack.c.b16 %v1121, %v1112
    %v1140 = vpack.c.b16 %v1122, %v1113
    %v1141 = vpack.c.b16 %v1123, %v1114
    %1142 = vrot.lane.b32.xlu0 %v1124, 92
    %v1143 = vpop.permute.xlu0 %1142
    %1144 = vrot.lane.b32.xlu0 %v1125, 92
    %v1145 = vpop.permute.xlu0 %1144
    %1146 = vrot.lane.b32.xlu0 %v1126, 92
    %v1147 = vpop.permute.xlu0 %1146
    %1148 = vrot.lane.b32.xlu0 %v1127, 92
    %v1149 = vpop.permute.xlu0 %1148
    %1150 = vrot.lane.b32.xlu0 %v1128, 92
    %v1151 = vpop.permute.xlu0 %1150
    %1152 = vrot.lane.b32.xlu0 %v1129, 92
    %v1153 = vpop.permute.xlu0 %1152
    %1154 = vrot.lane.b32.xlu0 %v1130, 92
    %v1155 = vpop.permute.xlu0 %1154
    %1156 = vrot.lane.b32.xlu0 %v1131, 92
    %v1157 = vpop.permute.xlu0 %1156
    %1158 = vrot.lane.b32.xlu0 %v1132, 92
    %v1159 = vpop.permute.xlu0 %1158
    %1160 = vrot.lane.b32.xlu0 %v1133, 92
    %v1161 = vpop.permute.xlu0 %1160
    %1162 = vrot.lane.b32.xlu0 %v1134, 92
    %v1163 = vpop.permute.xlu0 %1162
    %1164 = vrot.lane.b32.xlu0 %v1135, 92
    %v1165 = vpop.permute.xlu0 %1164
    %1166 = vrot.lane.b32.xlu0 %v1136, 92
    %v1167 = vpop.permute.xlu0 %1166
    %1168 = vrot.lane.b32.xlu0 %v1137, 92
    %v1169 = vpop.permute.xlu0 %1168
    %1170 = vrot.lane.b32.xlu0 %v1138, 92
    %v1171 = vpop.permute.xlu0 %1170
    %1172 = vrot.lane.b32.xlu0 %v1139, 92
    %v1173 = vpop.permute.xlu0 %1172
    %1174 = vrot.lane.b32.xlu0 %v1140, 92
    %v1175 = vpop.permute.xlu0 %1174
    %1176 = vrot.lane.b32.xlu0 %v1141, 92
    %v1177 = vpop.permute.xlu0 %1176
    %vm1178 = vcmask 752640
    %v1179 = vsel %vm1178, %v1143, %v1145
    %v1180 = vsel %vm1178, %v1145, %v1147
    %v1181 = vsel %vm1178, %v1147, %v1149
    %v1182 = vsel %vm1178, %v1149, %v1151
    %v1183 = vsel %vm1178, %v1151, %v1153
    %v1184 = vsel %vm1178, %v1153, %v1155
    %v1185 = vsel %vm1178, %v1155, %v1157
    %v1186 = vsel %vm1178, %v1157, %v1159
    %v1187 = vsel %vm1178, %v1161, %v1163
    %v1188 = vsel %vm1178, %v1163, %v1165
    %v1189 = vsel %vm1178, %v1165, %v1167
    %v1190 = vsel %vm1178, %v1167, %v1169
    %v1191 = vsel %vm1178, %v1169, %v1171
    %v1192 = vsel %vm1178, %v1171, %v1173
    %v1193 = vsel %vm1178, %v1173, %v1175
    %v1194 = vsel %vm1178, %v1175, %v1177
    %1211 = vst [vmem:[#allocation2 + $0x300] sm:$0xff] %v1179
    %1212 = vst [vmem:[#allocation2 + $0x308] sm:$0xff] %v1180
    %1213 = vst [vmem:[#allocation2 + $0x310] sm:$0xff] %v1181
    %1214 = vst [vmem:[#allocation2 + $0x318] sm:$0xff] %v1182
    %1215 = vst [vmem:[#allocation2 + $0x320] sm:$0xff] %v1183
    %1216 = vst [vmem:[#allocation2 + $0x328] sm:$0xff] %v1184
    %1217 = vst [vmem:[#allocation2 + $0x330] sm:$0xff] %v1185
    %1218 = vst [vmem:[#allocation2 + $0x338] sm:$0xff] %v1186
    %1219 = vst [vmem:[#allocation2 + $0x340] sm:$0xff] %v1187
    %1220 = vst [vmem:[#allocation2 + $0x348] sm:$0xff] %v1188
    %1221 = vst [vmem:[#allocation2 + $0x350] sm:$0xff] %v1189
    %1222 = vst [vmem:[#allocation2 + $0x358] sm:$0xff] %v1190
    %1223 = vst [vmem:[#allocation2 + $0x360] sm:$0xff] %v1191
    %1224 = vst [vmem:[#allocation2 + $0x368] sm:$0xff] %v1192
    %1225 = vst [vmem:[#allocation2 + $0x370] sm:$0xff] %v1193
    %1226 = vst [vmem:[#allocation2 + $0x378] sm:$0xff] %v1194
    %v1227 = vld [vmem:[#allocation5] sm:$0xff]
    %v1228 = vld [vmem:[#allocation5 + $0x8] sm:$0xff]
    %v1229 = vld [vmem:[#allocation5 + $0x10] sm:$0xff]
    %v1230 = vld [vmem:[#allocation5 + $0x18] sm:$0xff]
    %v1231 = vld [vmem:[#allocation5 + $0x20] sm:$0xf]
    %v1232 = vld [vmem:[#allocation5 + $0x28] sm:$0xff]
    %v1233 = vld [vmem:[#allocation5 + $0x30] sm:$0xff]
    %v1234 = vld [vmem:[#allocation5 + $0x38] sm:$0xff]
    %v1235 = vld [vmem:[#allocation5 + $0x40] sm:$0xff]
    %v1236 = vld [vmem:[#allocation5 + $0x48] sm:$0xf]
    %v1237 = vld [vmem:[#allocation5 + $0x50] sm:$0xff]
    %v1238 = vld [vmem:[#allocation5 + $0x58] sm:$0xff]
    %v1239 = vld [vmem:[#allocation5 + $0x60] sm:$0xff]
    %v1240 = vld [vmem:[#allocation5 + $0x68] sm:$0xff]
    %v1241 = vld [vmem:[#allocation5 + $0x70] sm:$0xf]
    %v1242 = vld [vmem:[#allocation5 + $0x78] sm:$0xff]
    %v1243 = vld [vmem:[#allocation5 + $0x80] sm:$0xff]
    %v1244 = vld [vmem:[#allocation5 + $0x88] sm:$0xff]
    %v1245 = vld [vmem:[#allocation5 + $0x90] sm:$0xff]
    %v1246 = vld [vmem:[#allocation5 + $0x98] sm:$0xf]
    %v1267 = vunpack.c.l.b16 %v1227
    %v1268 = vunpack.c.h.b16 %v1227
    %v1269 = vunpack.c.l.b16 %v1228
    %v1270 = vunpack.c.h.b16 %v1228
    %v1271 = vunpack.c.l.b16 %v1229
    %v1272 = vunpack.c.h.b16 %v1229
    %v1273 = vunpack.c.l.b16 %v1230
    %v1274 = vunpack.c.h.b16 %v1230
    %v1275 = vunpack.c.l.b16 %v1231
    %v1276 = vunpack.c.l.b16 %v1232
    %v1277 = vunpack.c.h.b16 %v1232
    %v1278 = vunpack.c.l.b16 %v1233
    %v1279 = vunpack.c.h.b16 %v1233
    %v1280 = vunpack.c.l.b16 %v1234
    %v1281 = vunpack.c.h.b16 %v1234
    %v1282 = vunpack.c.l.b16 %v1235
    %v1283 = vunpack.c.h.b16 %v1235
    %v1284 = vunpack.c.l.b16 %v1236
    %v1285 = vunpack.c.l.b16 %v1237
    %v1286 = vunpack.c.h.b16 %v1237
    %v1287 = vunpack.c.l.b16 %v1238
    %v1288 = vunpack.c.h.b16 %v1238
    %v1289 = vunpack.c.l.b16 %v1239
    %v1290 = vunpack.c.h.b16 %v1239
    %v1291 = vunpack.c.l.b16 %v1240
    %v1292 = vunpack.c.h.b16 %v1240
    %v1293 = vunpack.c.l.b16 %v1241
    %v1294 = vunpack.c.l.b16 %v1242
    %v1295 = vunpack.c.h.b16 %v1242
    %v1296 = vunpack.c.l.b16 %v1243
    %v1297 = vunpack.c.h.b16 %v1243
    %v1298 = vunpack.c.l.b16 %v1244
    %v1299 = vunpack.c.h.b16 %v1244
    %v1300 = vunpack.c.l.b16 %v1245
    %v1301 = vunpack.c.h.b16 %v1245
    %v1302 = vunpack.c.l.b16 %v1246
    %v1303 = vpack.c.b16 %v1276, %v1267
    %v1304 = vpack.c.b16 %v1277, %v1268
    %v1305 = vpack.c.b16 %v1278, %v1269
    %v1306 = vpack.c.b16 %v1279, %v1270
    %v1307 = vpack.c.b16 %v1280, %v1271
    %v1308 = vpack.c.b16 %v1281, %v1272
    %v1309 = vpack.c.b16 %v1282, %v1273
    %v1310 = vpack.c.b16 %v1283, %v1274
    %v1311 = vpack.c.b16 %v1284, %v1275
    %v1312 = vpack.c.b16 %v1294, %v1285
    %v1313 = vpack.c.b16 %v1295, %v1286
    %v1314 = vpack.c.b16 %v1296, %v1287
    %v1315 = vpack.c.b16 %v1297, %v1288
    %v1316 = vpack.c.b16 %v1298, %v1289
    %v1317 = vpack.c.b16 %v1299, %v1290
    %v1318 = vpack.c.b16 %v1300, %v1291
    %v1319 = vpack.c.b16 %v1301, %v1292
    %v1320 = vpack.c.b16 %v1302, %v1293
    %1321 = vrot.lane.b32.xlu0 %v1303, 91
    %v1322 = vpop.permute.xlu0 %1321
    %1323 = vrot.lane.b32.xlu0 %v1304, 91
    %v1324 = vpop.permute.xlu0 %1323
    %1325 = vrot.lane.b32.xlu0 %v1305, 91
    %v1326 = vpop.permute.xlu0 %1325
    %1327 = vrot.lane.b32.xlu0 %v1306, 91
    %v1328 = vpop.permute.xlu0 %1327
    %1329 = vrot.lane.b32.xlu0 %v1307, 91
    %v1330 = vpop.permute.xlu0 %1329
    %1331 = vrot.lane.b32.xlu0 %v1308, 91
    %v1332 = vpop.permute.xlu0 %1331
    %1333 = vrot.lane.b32.xlu0 %v1309, 91
    %v1334 = vpop.permute.xlu0 %1333
    %1335 = vrot.lane.b32.xlu0 %v1310, 91
    %v1336 = vpop.permute.xlu0 %1335
    %1337 = vrot.lane.b32.xlu0 %v1311, 91
    %v1338 = vpop.permute.xlu0 %1337
    %1339 = vrot.lane.b32.xlu0 %v1312, 91
    %v1340 = vpop.permute.xlu0 %1339
    %1341 = vrot.lane.b32.xlu0 %v1313, 91
    %v1342 = vpop.permute.xlu0 %1341
    %1343 = vrot.lane.b32.xlu0 %v1314, 91
    %v1344 = vpop.permute.xlu0 %1343
    %1345 = vrot.lane.b32.xlu0 %v1315, 91
    %v1346 = vpop.permute.xlu0 %1345
    %1347 = vrot.lane.b32.xlu0 %v1316, 91
    %v1348 = vpop.permute.xlu0 %1347
    %1349 = vrot.lane.b32.xlu0 %v1317, 91
    %v1350 = vpop.permute.xlu0 %1349
    %1351 = vrot.lane.b32.xlu0 %v1318, 91
    %v1352 = vpop.permute.xlu0 %1351
    %1353 = vrot.lane.b32.xlu0 %v1319, 91
    %v1354 = vpop.permute.xlu0 %1353
    %1355 = vrot.lane.b32.xlu0 %v1320, 91
    %v1356 = vpop.permute.xlu0 %1355
    %vm1357 = vcmask 744448
    %v1358 = vsel %vm1357, %v1322, %v1324
    %v1359 = vsel %vm1357, %v1324, %v1326
    %v1360 = vsel %vm1357, %v1326, %v1328
    %v1361 = vsel %vm1357, %v1328, %v1330
    %v1362 = vsel %vm1357, %v1330, %v1332
    %v1363 = vsel %vm1357, %v1332, %v1334
    %v1364 = vsel %vm1357, %v1334, %v1336
    %v1365 = vsel %vm1357, %v1336, %v1338
    %v1366 = vsel %vm1357, %v1340, %v1342
    %v1367 = vsel %vm1357, %v1342, %v1344
    %v1368 = vsel %vm1357, %v1344, %v1346
    %v1369 = vsel %vm1357, %v1346, %v1348
    %v1370 = vsel %vm1357, %v1348, %v1350
    %v1371 = vsel %vm1357, %v1350, %v1352
    %v1372 = vsel %vm1357, %v1352, %v1354
    %v1373 = vsel %vm1357, %v1354, %v1356
    %1390 = vst [vmem:[#allocation2 + $0x380] sm:$0xff] %v1358
    %1391 = vst [vmem:[#allocation2 + $0x388] sm:$0xff] %v1359
    %1392 = vst [vmem:[#allocation2 + $0x390] sm:$0xff] %v1360
    %1393 = vst [vmem:[#allocation2 + $0x398] sm:$0xff] %v1361
    %1394 = vst [vmem:[#allocation2 + $0x3a0] sm:$0xff] %v1362
    %1395 = vst [vmem:[#allocation2 + $0x3a8] sm:$0xff] %v1363
    %1396 = vst [vmem:[#allocation2 + $0x3b0] sm:$0xff] %v1364
    %1397 = vst [vmem:[#allocation2 + $0x3b8] sm:$0xff] %v1365
    %1398 = vst [vmem:[#allocation2 + $0x3c0] sm:$0xff] %v1366
    %1399 = vst [vmem:[#allocation2 + $0x3c8] sm:$0xff] %v1367
    %1400 = vst [vmem:[#allocation2 + $0x3d0] sm:$0xff] %v1368
    %1401 = vst [vmem:[#allocation2 + $0x3d8] sm:$0xff] %v1369
    %1402 = vst [vmem:[#allocation2 + $0x3e0] sm:$0xff] %v1370
    %1403 = vst [vmem:[#allocation2 + $0x3e8] sm:$0xff] %v1371
    %1404 = vst [vmem:[#allocation2 + $0x3f0] sm:$0xff] %v1372
    %1405 = vst [vmem:[#allocation2 + $0x3f8] sm:$0xff] %v1373
    %v1406 = vld [vmem:[#allocation5] sm:$0xff]
    %v1407 = vld [vmem:[#allocation5 + $0x8] sm:$0xff]
    %v1408 = vld [vmem:[#allocation5 + $0x10] sm:$0xff]
    %v1409 = vld [vmem:[#allocation5 + $0x18] sm:$0xff]
    %v1410 = vld [vmem:[#allocation5 + $0x20] sm:$0xf]
    %v1411 = vld [vmem:[#allocation5 + $0x28] sm:$0xff]
    %v1412 = vld [vmem:[#allocation5 + $0x30] sm:$0xff]
    %v1413 = vld [vmem:[#allocation5 + $0x38] sm:$0xff]
    %v1414 = vld [vmem:[#allocation5 + $0x40] sm:$0xff]
    %v1415 = vld [vmem:[#allocation5 + $0x48] sm:$0xf]
    %v1416 = vld [vmem:[#allocation5 + $0x50] sm:$0xff]
    %v1417 = vld [vmem:[#allocation5 + $0x58] sm:$0xff]
    %v1418 = vld [vmem:[#allocation5 + $0x60] sm:$0xff]
    %v1419 = vld [vmem:[#allocation5 + $0x68] sm:$0xff]
    %v1420 = vld [vmem:[#allocation5 + $0x70] sm:$0xf]
    %v1421 = vld [vmem:[#allocation5 + $0x78] sm:$0xff]
    %v1422 = vld [vmem:[#allocation5 + $0x80] sm:$0xff]
    %v1423 = vld [vmem:[#allocation5 + $0x88] sm:$0xff]
    %v1424 = vld [vmem:[#allocation5 + $0x90] sm:$0xff]
    %v1425 = vld [vmem:[#allocation5 + $0x98] sm:$0xf]
    %v1446 = vunpack.c.l.b16 %v1406
    %v1447 = vunpack.c.h.b16 %v1406
    %v1448 = vunpack.c.l.b16 %v1407
    %v1449 = vunpack.c.h.b16 %v1407
    %v1450 = vunpack.c.l.b16 %v1408
    %v1451 = vunpack.c.h.b16 %v1408
    %v1452 = vunpack.c.l.b16 %v1409
    %v1453 = vunpack.c.h.b16 %v1409
    %v1454 = vunpack.c.l.b16 %v1410
    %v1455 = vunpack.c.l.b16 %v1411
    %v1456 = vunpack.c.h.b16 %v1411
    %v1457 = vunpack.c.l.b16 %v1412
    %v1458 = vunpack.c.h.b16 %v1412
    %v1459 = vunpack.c.l.b16 %v1413
    %v1460 = vunpack.c.h.b16 %v1413
    %v1461 = vunpack.c.l.b16 %v1414
    %v1462 = vunpack.c.h.b16 %v1414
    %v1463 = vunpack.c.l.b16 %v1415
    %v1464 = vunpack.c.l.b16 %v1416
    %v1465 = vunpack.c.h.b16 %v1416
    %v1466 = vunpack.c.l.b16 %v1417
    %v1467 = vunpack.c.h.b16 %v1417
    %v1468 = vunpack.c.l.b16 %v1418
    %v1469 = vunpack.c.h.b16 %v1418
    %v1470 = vunpack.c.l.b16 %v1419
    %v1471 = vunpack.c.h.b16 %v1419
    %v1472 = vunpack.c.l.b16 %v1420
    %v1473 = vunpack.c.l.b16 %v1421
    %v1474 = vunpack.c.h.b16 %v1421
    %v1475 = vunpack.c.l.b16 %v1422
    %v1476 = vunpack.c.h.b16 %v1422
    %v1477 = vunpack.c.l.b16 %v1423
    %v1478 = vunpack.c.h.b16 %v1423
    %v1479 = vunpack.c.l.b16 %v1424
    %v1480 = vunpack.c.h.b16 %v1424
    %v1481 = vunpack.c.l.b16 %v1425
    %v1482 = vpack.c.b16 %v1455, %v1446
    %v1483 = vpack.c.b16 %v1456, %v1447
    %v1484 = vpack.c.b16 %v1457, %v1448
    %v1485 = vpack.c.b16 %v1458, %v1449
    %v1486 = vpack.c.b16 %v1459, %v1450
    %v1487 = vpack.c.b16 %v1460, %v1451
    %v1488 = vpack.c.b16 %v1461, %v1452
    %v1489 = vpack.c.b16 %v1462, %v1453
    %v1490 = vpack.c.b16 %v1463, %v1454
    %v1491 = vpack.c.b16 %v1473, %v1464
    %v1492 = vpack.c.b16 %v1474, %v1465
    %v1493 = vpack.c.b16 %v1475, %v1466
    %v1494 = vpack.c.b16 %v1476, %v1467
    %v1495 = vpack.c.b16 %v1477, %v1468
    %v1496 = vpack.c.b16 %v1478, %v1469
    %v1497 = vpack.c.b16 %v1479, %v1470
    %v1498 = vpack.c.b16 %v1480, %v1471
    %v1499 = vpack.c.b16 %v1481, %v1472
    %1500 = vrot.lane.b32.xlu0 %v1482, 90
    %v1501 = vpop.permute.xlu0 %1500
    %1502 = vrot.lane.b32.xlu0 %v1483, 90
    %v1503 = vpop.permute.xlu0 %1502
    %1504 = vrot.lane.b32.xlu0 %v1484, 90
    %v1505 = vpop.permute.xlu0 %1504
    %1506 = vrot.lane.b32.xlu0 %v1485, 90
    %v1507 = vpop.permute.xlu0 %1506
    %1508 = vrot.lane.b32.xlu0 %v1486, 90
    %v1509 = vpop.permute.xlu0 %1508
    %1510 = vrot.lane.b32.xlu0 %v1487, 90
    %v1511 = vpop.permute.xlu0 %1510
    %1512 = vrot.lane.b32.xlu0 %v1488, 90
    %v1513 = vpop.permute.xlu0 %1512
    %1514 = vrot.lane.b32.xlu0 %v1489, 90
    %v1515 = vpop.permute.xlu0 %1514
    %1516 = vrot.lane.b32.xlu0 %v1490, 90
    %v1517 = vpop.permute.xlu0 %1516
    %1518 = vrot.lane.b32.xlu0 %v1491, 90
    %v1519 = vpop.permute.xlu0 %1518
    %1520 = vrot.lane.b32.xlu0 %v1492, 90
    %v1521 = vpop.permute.xlu0 %1520
    %1522 = vrot.lane.b32.xlu0 %v1493, 90
    %v1523 = vpop.permute.xlu0 %1522
    %1524 = vrot.lane.b32.xlu0 %v1494, 90
    %v1525 = vpop.permute.xlu0 %1524
    %1526 = vrot.lane.b32.xlu0 %v1495, 90
    %v1527 = vpop.permute.xlu0 %1526
    %1528 = vrot.lane.b32.xlu0 %v1496, 90
    %v1529 = vpop.permute.xlu0 %1528
    %1530 = vrot.lane.b32.xlu0 %v1497, 90
    %v1531 = vpop.permute.xlu0 %1530
    %1532 = vrot.lane.b32.xlu0 %v1498, 90
    %v1533 = vpop.permute.xlu0 %1532
    %1534 = vrot.lane.b32.xlu0 %v1499, 90
    %v1535 = vpop.permute.xlu0 %1534
    %vm1536 = vcmask 736256
    %v1537 = vsel %vm1536, %v1501, %v1503
    %v1538 = vsel %vm1536, %v1503, %v1505
    %v1539 = vsel %vm1536, %v1505, %v1507
    %v1540 = vsel %vm1536, %v1507, %v1509
    %v1541 = vsel %vm1536, %v1509, %v1511
    %v1542 = vsel %vm1536, %v1511, %v1513
    %v1543 = vsel %vm1536, %v1513, %v1515
    %v1544 = vsel %vm1536, %v1515, %v1517
    %v1545 = vsel %vm1536, %v1519, %v1521
    %v1546 = vsel %vm1536, %v1521, %v1523
    %v1547 = vsel %vm1536, %v1523, %v1525
    %v1548 = vsel %vm1536, %v1525, %v1527
    %v1549 = vsel %vm1536, %v1527, %v1529
    %v1550 = vsel %vm1536, %v1529, %v1531
    %v1551 = vsel %vm1536, %v1531, %v1533
    %v1552 = vsel %vm1536, %v1533, %v1535
    %1569 = vst [vmem:[#allocation2 + $0x400] sm:$0xff] %v1537
    %1570 = vst [vmem:[#allocation2 + $0x408] sm:$0xff] %v1538
    %1571 = vst [vmem:[#allocation2 + $0x410] sm:$0xff] %v1539
    %1572 = vst [vmem:[#allocation2 + $0x418] sm:$0xff] %v1540
    %1573 = vst [vmem:[#allocation2 + $0x420] sm:$0xff] %v1541
    %1574 = vst [vmem:[#allocation2 + $0x428] sm:$0xff] %v1542
    %1575 = vst [vmem:[#allocation2 + $0x430] sm:$0xff] %v1543
    %1576 = vst [vmem:[#allocation2 + $0x438] sm:$0xff] %v1544
    %1577 = vst [vmem:[#allocation2 + $0x440] sm:$0xff] %v1545
    %1578 = vst [vmem:[#allocation2 + $0x448] sm:$0xff] %v1546
    %1579 = vst [vmem:[#allocation2 + $0x450] sm:$0xff] %v1547
    %1580 = vst [vmem:[#allocation2 + $0x458] sm:$0xff] %v1548
    %1581 = vst [vmem:[#allocation2 + $0x460] sm:$0xff] %v1549
    %1582 = vst [vmem:[#allocation2 + $0x468] sm:$0xff] %v1550
    %1583 = vst [vmem:[#allocation2 + $0x470] sm:$0xff] %v1551
    %1584 = vst [vmem:[#allocation2 + $0x478] sm:$0xff] %v1552
    %v1585 = vld [vmem:[%s1] sm:$0xff]
    %v1586 = vld [vmem:[%s1 + $0x8] sm:$0xf]
    %v1587 = vld [vmem:[#allocation2] sm:$0xff]
    %v1588 = vld [vmem:[#allocation2 + $0x8] sm:$0xff]
    %v1589 = vld [vmem:[#allocation2 + $0x10] sm:$0xff]
    %v1590 = vld [vmem:[#allocation2 + $0x18] sm:$0xff]
    %v1591 = vld [vmem:[#allocation2 + $0x20] sm:$0xff]
    %v1592 = vld [vmem:[#allocation2 + $0x28] sm:$0xff]
    %v1593 = vld [vmem:[#allocation2 + $0x30] sm:$0xff]
    %v1594 = vld [vmem:[#allocation2 + $0x38] sm:$0xff]
    %v1595 = vld [vmem:[#allocation2 + $0x40] sm:$0xff]
    %v1596 = vld [vmem:[#allocation2 + $0x48] sm:$0xff]
    %v1597 = vld [vmem:[#allocation2 + $0x50] sm:$0xff]
    %v1598 = vld [vmem:[#allocation2 + $0x58] sm:$0xff]
    %v1599 = vld [vmem:[#allocation2 + $0x60] sm:$0xff]
    %v1600 = vld [vmem:[#allocation2 + $0x68] sm:$0xff]
    %v1601 = vld [vmem:[#allocation2 + $0x70] sm:$0xff]
    %v1602 = vld [vmem:[#allocation2 + $0x78] sm:$0xff]
    %v1603 = vld [vmem:[#allocation2 + $0x80] sm:$0xff]
    %v1604 = vld [vmem:[#allocation2 + $0x88] sm:$0xff]
    %v1605 = vld [vmem:[#allocation2 + $0x90] sm:$0xff]
    %v1606 = vld [vmem:[#allocation2 + $0x98] sm:$0xff]
    %v1607 = vld [vmem:[#allocation2 + $0xa0] sm:$0xff]
    %v1608 = vld [vmem:[#allocation2 + $0xa8] sm:$0xff]
    %v1609 = vld [vmem:[#allocation2 + $0xb0] sm:$0xff]
    %v1610 = vld [vmem:[#allocation2 + $0xb8] sm:$0xff]
    %v1611 = vld [vmem:[#allocation2 + $0xc0] sm:$0xff]
    %v1612 = vld [vmem:[#allocation2 + $0xc8] sm:$0xff]
    %v1613 = vld [vmem:[#allocation2 + $0xd0] sm:$0xff]
    %v1614 = vld [vmem:[#allocation2 + $0xd8] sm:$0xff]
    %v1615 = vld [vmem:[#allocation2 + $0xe0] sm:$0xff]
    %v1616 = vld [vmem:[#allocation2 + $0xe8] sm:$0xff]
    %v1617 = vld [vmem:[#allocation2 + $0xf0] sm:$0xff]
    %v1618 = vld [vmem:[#allocation2 + $0xf8] sm:$0xff]
    %v1619 = vld [vmem:[#allocation2 + $0x100] sm:$0xff]
    %v1620 = vld [vmem:[#allocation2 + $0x108] sm:$0xff]
    %v1621 = vld [vmem:[#allocation2 + $0x110] sm:$0xff]
    %v1622 = vld [vmem:[#allocation2 + $0x118] sm:$0xff]
    %v1623 = vld [vmem:[#allocation2 + $0x120] sm:$0xff]
    %v1624 = vld [vmem:[#allocation2 + $0x128] sm:$0xff]
    %v1625 = vld [vmem:[#allocation2 + $0x130] sm:$0xff]
    %v1626 = vld [vmem:[#allocation2 + $0x138] sm:$0xff]
    %v1627 = vld [vmem:[#allocation2 + $0x140] sm:$0xff]
    %v1628 = vld [vmem:[#allocation2 + $0x148] sm:$0xff]
    %v1629 = vld [vmem:[#allocation2 + $0x150] sm:$0xff]
    %v1630 = vld [vmem:[#allocation2 + $0x158] sm:$0xff]
    %v1631 = vld [vmem:[#allocation2 + $0x160] sm:$0xff]
    %v1632 = vld [vmem:[#allocation2 + $0x168] sm:$0xff]
    %v1633 = vld [vmem:[#allocation2 + $0x170] sm:$0xff]
    %v1634 = vld [vmem:[#allocation2 + $0x178] sm:$0xff]
    %v1635 = vld [vmem:[#allocation2 + $0x180] sm:$0xff]
    %v1636 = vld [vmem:[#allocation2 + $0x188] sm:$0xff]
    %v1637 = vld [vmem:[#allocation2 + $0x190] sm:$0xff]
    %v1638 = vld [vmem:[#allocation2 + $0x198] sm:$0xff]
    %v1639 = vld [vmem:[#allocation2 + $0x1a0] sm:$0xff]
    %v1640 = vld [vmem:[#allocation2 + $0x1a8] sm:$0xff]
    %v1641 = vld [vmem:[#allocation2 + $0x1b0] sm:$0xff]
    %v1642 = vld [vmem:[#allocation2 + $0x1b8] sm:$0xff]
    %v1643 = vld [vmem:[#allocation2 + $0x1c0] sm:$0xff]
    %v1644 = vld [vmem:[#allocation2 + $0x1c8] sm:$0xff]
    %v1645 = vld [vmem:[#allocation2 + $0x1d0] sm:$0xff]
    %v1646 = vld [vmem:[#allocation2 + $0x1d8] sm:$0xff]
    %v1647 = vld [vmem:[#allocation2 + $0x1e0] sm:$0xff]
    %v1648 = vld [vmem:[#allocation2 + $0x1e8] sm:$0xff]
    %v1649 = vld [vmem:[#allocation2 + $0x1f0] sm:$0xff]
    %v1650 = vld [vmem:[#allocation2 + $0x1f8] sm:$0xff]
    %v1651 = vld [vmem:[#allocation2 + $0x200] sm:$0xff]
    %v1652 = vld [vmem:[#allocation2 + $0x208] sm:$0xff]
    %v1653 = vld [vmem:[#allocation2 + $0x210] sm:$0xff]
    %v1654 = vld [vmem:[#allocation2 + $0x218] sm:$0xff]
    %v1655 = vld [vmem:[#allocation2 + $0x220] sm:$0xff]
    %v1656 = vld [vmem:[#allocation2 + $0x228] sm:$0xff]
    %v1657 = vld [vmem:[#allocation2 + $0x230] sm:$0xff]
    %v1658 = vld [vmem:[#allocation2 + $0x238] sm:$0xff]
    %v1659 = vld [vmem:[#allocation2 + $0x240] sm:$0xff]
    %v1660 = vld [vmem:[#allocation2 + $0x248] sm:$0xff]
    %v1661 = vld [vmem:[#allocation2 + $0x250] sm:$0xff]
    %v1662 = vld [vmem:[#allocation2 + $0x258] sm:$0xff]
    %v1663 = vld [vmem:[#allocation2 + $0x260] sm:$0xff]
    %v1664 = vld [vmem:[#allocation2 + $0x268] sm:$0xff]
    %v1665 = vld [vmem:[#allocation2 + $0x270] sm:$0xff]
    %v1666 = vld [vmem:[#allocation2 + $0x278] sm:$0xff]
    %v1667 = vld [vmem:[#allocation2 + $0x280] sm:$0xff]
    %v1668 = vld [vmem:[#allocation2 + $0x288] sm:$0xff]
    %v1669 = vld [vmem:[#allocation2 + $0x290] sm:$0xff]
    %v1670 = vld [vmem:[#allocation2 + $0x298] sm:$0xff]
    %v1671 = vld [vmem:[#allocation2 + $0x2a0] sm:$0xff]
    %v1672 = vld [vmem:[#allocation2 + $0x2a8] sm:$0xff]
    %v1673 = vld [vmem:[#allocation2 + $0x2b0] sm:$0xff]
    %v1674 = vld [vmem:[#allocation2 + $0x2b8] sm:$0xff]
    %v1675 = vld [vmem:[#allocation2 + $0x2c0] sm:$0xff]
    %v1676 = vld [vmem:[#allocation2 + $0x2c8] sm:$0xff]
    %v1677 = vld [vmem:[#allocation2 + $0x2d0] sm:$0xff]
    %v1678 = vld [vmem:[#allocation2 + $0x2d8] sm:$0xff]
    %v1679 = vld [vmem:[#allocation2 + $0x2e0] sm:$0xff]
    %v1680 = vld [vmem:[#allocation2 + $0x2e8] sm:$0xff]
    %v1681 = vld [vmem:[#allocation2 + $0x2f0] sm:$0xff]
    %v1682 = vld [vmem:[#allocation2 + $0x2f8] sm:$0xff]
    %v1683 = vld [vmem:[#allocation2 + $0x300] sm:$0xff]
    %v1684 = vld [vmem:[#allocation2 + $0x308] sm:$0xff]
    %v1685 = vld [vmem:[#allocation2 + $0x310] sm:$0xff]
    %v1686 = vld [vmem:[#allocation2 + $0x318] sm:$0xff]
    %v1687 = vld [vmem:[#allocation2 + $0x320] sm:$0xff]
    %v1688 = vld [vmem:[#allocation2 + $0x328] sm:$0xff]
    %v1689 = vld [vmem:[#allocation2 + $0x330] sm:$0xff]
    %v1690 = vld [vmem:[#allocation2 + $0x338] sm:$0xff]
    %v1691 = vld [vmem:[#allocation2 + $0x340] sm:$0xff]
    %v1692 = vld [vmem:[#allocation2 + $0x348] sm:$0xff]
    %v1693 = vld [vmem:[#allocation2 + $0x350] sm:$0xff]
    %v1694 = vld [vmem:[#allocation2 + $0x358] sm:$0xff]
    %v1695 = vld [vmem:[#allocation2 + $0x360] sm:$0xff]
    %v1696 = vld [vmem:[#allocation2 + $0x368] sm:$0xff]
    %v1697 = vld [vmem:[#allocation2 + $0x370] sm:$0xff]
    %v1698 = vld [vmem:[#allocation2 + $0x378] sm:$0xff]
    %v1699 = vld [vmem:[#allocation2 + $0x380] sm:$0xff]
    %v1700 = vld [vmem:[#allocation2 + $0x388] sm:$0xff]
    %v1701 = vld [vmem:[#allocation2 + $0x390] sm:$0xff]
    %v1702 = vld [vmem:[#allocation2 + $0x398] sm:$0xff]
    %v1703 = vld [vmem:[#allocation2 + $0x3a0] sm:$0xff]
    %v1704 = vld [vmem:[#allocation2 + $0x3a8] sm:$0xff]
    %v1705 = vld [vmem:[#allocation2 + $0x3b0] sm:$0xff]
    %v1706 = vld [vmem:[#allocation2 + $0x3b8] sm:$0xff]
    %v1707 = vld [vmem:[#allocation2 + $0x3c0] sm:$0xff]
    %v1708 = vld [vmem:[#allocation2 + $0x3c8] sm:$0xff]
    %v1709 = vld [vmem:[#allocation2 + $0x3d0] sm:$0xff]
    %v1710 = vld [vmem:[#allocation2 + $0x3d8] sm:$0xff]
    %v1711 = vld [vmem:[#allocation2 + $0x3e0] sm:$0xff]
    %v1712 = vld [vmem:[#allocation2 + $0x3e8] sm:$0xff]
    %v1713 = vld [vmem:[#allocation2 + $0x3f0] sm:$0xff]
    %v1714 = vld [vmem:[#allocation2 + $0x3f8] sm:$0xff]
    %v1715 = vld [vmem:[#allocation2 + $0x400] sm:$0xff]
    %v1716 = vld [vmem:[#allocation2 + $0x408] sm:$0xff]
    %v1717 = vld [vmem:[#allocation2 + $0x410] sm:$0xff]
    %v1718 = vld [vmem:[#allocation2 + $0x418] sm:$0xff]
    %v1719 = vld [vmem:[#allocation2 + $0x420] sm:$0xff]
    %v1720 = vld [vmem:[#allocation2 + $0x428] sm:$0xff]
    %v1721 = vld [vmem:[#allocation2 + $0x430] sm:$0xff]
    %v1722 = vld [vmem:[#allocation2 + $0x438] sm:$0xff]
    %v1723 = vld [vmem:[#allocation2 + $0x440] sm:$0xff]
    %v1724 = vld [vmem:[#allocation2 + $0x448] sm:$0xff]
    %v1725 = vld [vmem:[#allocation2 + $0x450] sm:$0xff]
    %v1726 = vld [vmem:[#allocation2 + $0x458] sm:$0xff]
    %v1727 = vld [vmem:[#allocation2 + $0x460] sm:$0xff]
    %v1728 = vld [vmem:[#allocation2 + $0x468] sm:$0xff]
    %v1729 = vld [vmem:[#allocation2 + $0x470] sm:$0xff]
    %v1730 = vld [vmem:[#allocation2 + $0x478] sm:$0xff]
    %v1731 = vld [vmem:[%s2] sm:$0xff]
    %1733 = vset.pattern.permute.xlu0 0
    %1734 = vperm.xlu0 %1733, %v1731
    %v1735 = vpop.permute.xlu0 %1734
    %v1739 = vunpack.c.l.b16 %v1585
    %v1740 = vunpack.c.h.b16 %v1585
    %v1741 = vunpack.c.l.b16 %v1586
    %v1742 = vpack.c.b16 %v1739, %v1739
    %v1743 = vpack.c.b16 %v1740, %v1740
    %v1744 = vpack.c.b16 %v1741, %v1741
    %vm1747 = vcmask 261120
    %v1749 = vsel %vm1747, %v1744, 0
    %1751 = vmatprep.subr.bf16.mxu0 %v1588
    %1752 = vmatpush1.bf16.msra.mxu0 %v1587
    %1753 = vmatprep.subr.bf16.mxu0 %v1596
    %1754 = vmatpush1.bf16.msra.mxu0 %v1595
    %1755 = vmatprep.subr.bf16.mxu0 %v1604
    %1756 = vmatpush1.bf16.msra.mxu0 %v1603
    %1757 = vmatprep.subr.bf16.mxu0 %v1612
    %1758 = vmatpush1.bf16.msra.mxu0 %v1611
    %1759 = vmatprep.subr.bf16.mxu0 %v1620
    %1760 = vmatpush1.bf16.msra.mxu0 %v1619
    %1761 = vmatprep.subr.bf16.mxu0 %v1628
    %1762 = vmatpush1.bf16.msra.mxu0 %v1627
    %1763 = vmatprep.subr.bf16.mxu0 %v1636
    %1764 = vmatpush1.bf16.msra.mxu0 %v1635
    %1765 = vmatprep.subr.bf16.mxu0 %v1644
    %1766 = vmatpush1.bf16.msra.mxu0 %v1643
    %1767 = vmatprep.subr.bf16.mxu0 %v1652
    %1768 = vmatpush1.bf16.msra.mxu0 %v1651
    %1769 = vmatprep.subr.bf16.mxu0 %v1660
    %1770 = vmatpush1.bf16.msra.mxu0 %v1659
    %1771 = vmatprep.subr.bf16.mxu0 %v1668
    %1772 = vmatpush1.bf16.msra.mxu0 %v1667
    %1773 = vmatprep.subr.bf16.mxu0 %v1676
    %1774 = vmatpush1.bf16.msra.mxu0 %v1675
    %1775 = vmatprep.subr.bf16.mxu0 %v1684
    %1776 = vmatpush1.bf16.msra.mxu0 %v1683
    %1777 = vmatprep.subr.bf16.mxu0 %v1692
    %1778 = vmatpush1.bf16.msra.mxu0 %v1691
    %1779 = vmatprep.subr.bf16.mxu0 %v1700
    %1780 = vmatpush1.bf16.msra.mxu0 %v1699
    %1781 = vmatprep.subr.bf16.mxu0 %v1708
    %1782 = vmatpush1.bf16.msra.mxu0 %v1707
    %1783 = vmatprep.mubr.bf16.mxu0 %v1743
    %1784 = vmatmul.mubr.bf16.gmra.mrb[0].mxu0 %v1742
    %v1785 = vpop.f32.mrb[0].mxu0
    %v1786 = vadd.f32 %v1735, %v1785
    %v1787 = vpop.f32.mrb[0].mxu0
    %v1788 = vadd.f32 %v1735, %v1787
    %v1789 = vpop.f32.mrb[0].mxu0
    %v1790 = vpop.f32.mrb[0].mxu0
    %1791 = vdwg.mxu0
    %1792 = vmatprep.subr.bf16.mxu0 %v1716
    %1793 = vmatpush1.bf16.msra.mxu0 %v1715
    %1794 = vmatprep.subr.bf16.mxu0 %v1724
    %1795 = vmatpush1.bf16.msra.mxu0 %v1723
    %1796 = vmatprep.subr.bf16.mxu0 0
    %1797 = vmatpush1.bf16.msra.mxu0 0
    %1798 = vmatprep.subr.bf16.mxu0 0
    %1799 = vmatpush1.bf16.msra.mxu0 0
    %1800 = vmatprep.subr.bf16.mxu0 0
    %1801 = vmatpush1.bf16.msra.mxu0 0
    %1802 = vmatprep.subr.bf16.mxu0 0
    %1803 = vmatpush1.bf16.msra.mxu0 0
    %1804 = vmatprep.subr.bf16.mxu0 0
    %1805 = vmatpush1.bf16.msra.mxu0 0
    %1806 = vmatprep.subr.bf16.mxu0 0
    %1807 = vmatpush1.bf16.msra.mxu0 0
    %1808 = vmatprep.subr.bf16.mxu0 0
    %1809 = vmatpush1.bf16.msra.mxu0 0
    %1810 = vmatprep.subr.bf16.mxu0 0
    %1811 = vmatpush1.bf16.msra.mxu0 0
    %1812 = vmatprep.subr.bf16.mxu0 0
    %1813 = vmatpush1.bf16.msra.mxu0 0
    %1814 = vmatprep.subr.bf16.mxu0 0
    %1815 = vmatpush1.bf16.msra.mxu0 0
    %1816 = vmatprep.subr.bf16.mxu0 0
    %1817 = vmatpush1.bf16.msra.mxu0 0
    %1818 = vmatprep.subr.bf16.mxu0 0
    %1819 = vmatpush1.bf16.msra.mxu0 0
    %1820 = vmatprep.subr.bf16.mxu0 0
    %1821 = vmatpush1.bf16.msra.mxu0 0
    %1822 = vmatprep.subr.bf16.mxu0 0
    %1823 = vmatpush1.bf16.msra.mxu0 0
    %1824 = vmatprep.mubr.bf16.mxu0 0
    %1825 = vmatmul.mubr.bf16.gmra.mrb[0].mxu0 %v1749
    %v1826 = vpop.f32.mrb[0].mxu0
    %v1827 = vadd.f32 %v1786, %v1826
    %v1828 = vpop.f32.mrb[0].mxu0
    %v1829 = vadd.f32 %v1788, %v1828
    %v1830 = vpop.f32.mrb[0].mxu0
    %v1831 = vpop.f32.mrb[0].mxu0
    %1832 = vdwg.mxu0
    %1833 = vmatprep.subr.bf16.mxu0 %v1590
    %1834 = vmatpush1.bf16.msra.mxu0 %v1589
    %1835 = vmatprep.subr.bf16.mxu0 %v1598
    %1836 = vmatpush1.bf16.msra.mxu0 %v1597
    %1837 = vmatprep.subr.bf16.mxu0 %v1606
    %1838 = vmatpush1.bf16.msra.mxu0 %v1605
    %1839 = vmatprep.subr.bf16.mxu0 %v1614
    %1840 = vmatpush1.bf16.msra.mxu0 %v1613
    %1841 = vmatprep.subr.bf16.mxu0 %v1622
    %1842 = vmatpush1.bf16.msra.mxu0 %v1621
    %1843 = vmatprep.subr.bf16.mxu0 %v1630
    %1844 = vmatpush1.bf16.msra.mxu0 %v1629
    %1845 = vmatprep.subr.bf16.mxu0 %v1638
    %1846 = vmatpush1.bf16.msra.mxu0 %v1637
    %1847 = vmatprep.subr.bf16.mxu0 %v1646
    %1848 = vmatpush1.bf16.msra.mxu0 %v1645
    %1849 = vmatprep.subr.bf16.mxu0 %v1654
    %1850 = vmatpush1.bf16.msra.mxu0 %v1653
    %1851 = vmatprep.subr.bf16.mxu0 %v1662
    %1852 = vmatpush1.bf16.msra.mxu0 %v1661
    %1853 = vmatprep.subr.bf16.mxu0 %v1670
    %1854 = vmatpush1.bf16.msra.mxu0 %v1669
    %1855 = vmatprep.subr.bf16.mxu0 %v1678
    %1856 = vmatpush1.bf16.msra.mxu0 %v1677
    %1857 = vmatprep.subr.bf16.mxu0 %v1686
    %1858 = vmatpush1.bf16.msra.mxu0 %v1685
    %1859 = vmatprep.subr.bf16.mxu0 %v1694
    %1860 = vmatpush1.bf16.msra.mxu0 %v1693
    %1861 = vmatprep.subr.bf16.mxu0 %v1702
    %1862 = vmatpush1.bf16.msra.mxu0 %v1701
    %1863 = vmatprep.subr.bf16.mxu0 %v1710
    %1864 = vmatpush1.bf16.msra.mxu0 %v1709
    %1865 = vmatprep.mubr.bf16.mxu0 %v1743
    %1866 = vmatmul.mubr.bf16.gmra.mrb[0].mxu0 %v1742
    %v1867 = vpop.f32.mrb[0].mxu0
    %v1868 = vadd.f32 %v1735, %v1867
    %v1869 = vpop.f32.mrb[0].mxu0
    %v1870 = vpop.f32.mrb[0].mxu0
    %v1871 = vpop.f32.mrb[0].mxu0
    %1872 = vdwg.mxu0
    %1873 = vmatprep.subr.bf16.mxu0 %v1718
    %1874 = vmatpush1.bf16.msra.mxu0 %v1717
    %1875 = vmatprep.subr.bf16.mxu0 %v1726
    %1876 = vmatpush1.bf16.msra.mxu0 %v1725
    %1877 = vmatprep.subr.bf16.mxu0 0
    %1878 = vmatpush1.bf16.msra.mxu0 0
    %1879 = vmatprep.subr.bf16.mxu0 0
    %1880 = vmatpush1.bf16.msra.mxu0 0
    %1881 = vmatprep.subr.bf16.mxu0 0
    %1882 = vmatpush1.bf16.msra.mxu0 0
    %1883 = vmatprep.subr.bf16.mxu0 0
    %1884 = vmatpush1.bf16.msra.mxu0 0
    %1885 = vmatprep.subr.bf16.mxu0 0
    %1886 = vmatpush1.bf16.msra.mxu0 0
    %1887 = vmatprep.subr.bf16.mxu0 0
    %1888 = vmatpush1.bf16.msra.mxu0 0
    %1889 = vmatprep.subr.bf16.mxu0 0
    %1890 = vmatpush1.bf16.msra.mxu0 0
    %1891 = vmatprep.subr.bf16.mxu0 0
    %1892 = vmatpush1.bf16.msra.mxu0 0
    %1893 = vmatprep.subr.bf16.mxu0 0
    %1894 = vmatpush1.bf16.msra.mxu0 0
    %1895 = vmatprep.subr.bf16.mxu0 0
    %1896 = vmatpush1.bf16.msra.mxu0 0
    %1897 = vmatprep.subr.bf16.mxu0 0
    %1898 = vmatpush1.bf16.msra.mxu0 0
    %1899 = vmatprep.subr.bf16.mxu0 0
    %1900 = vmatpush1.bf16.msra.mxu0 0
    %1901 = vmatprep.subr.bf16.mxu0 0
    %1902 = vmatpush1.bf16.msra.mxu0 0
    %1903 = vmatprep.subr.bf16.mxu0 0
    %1904 = vmatpush1.bf16.msra.mxu0 0
    %1905 = vmatprep.mubr.bf16.mxu0 0
    %1906 = vmatmul.mubr.bf16.gmra.mrb[0].mxu0 %v1749
    %v1907 = vpop.f32.mrb[0].mxu0
    %v1908 = vadd.f32 %v1868, %v1907
    %v1909 = vpop.f32.mrb[0].mxu0
    %v1910 = vpop.f32.mrb[0].mxu0
    %v1911 = vpop.f32.mrb[0].mxu0
    %1912 = vdwg.mxu0
    %1913 = vmatprep.subr.bf16.mxu0 %v1592
    %1914 = vmatpush1.bf16.msra.mxu0 %v1591
    %1915 = vmatprep.subr.bf16.mxu0 %v1600
    %1916 = vmatpush1.bf16.msra.mxu0 %v1599
    %1917 = vmatprep.subr.bf16.mxu0 %v1608
    %1918 = vmatpush1.bf16.msra.mxu0 %v1607
    %1919 = vmatprep.subr.bf16.mxu0 %v1616
    %1920 = vmatpush1.bf16.msra.mxu0 %v1615
    %1921 = vmatprep.subr.bf16.mxu0 %v1624
    %1922 = vmatpush1.bf16.msra.mxu0 %v1623
    %1923 = vmatprep.subr.bf16.mxu0 %v1632
    %1924 = vmatpush1.bf16.msra.mxu0 %v1631
    %1925 = vmatprep.subr.bf16.mxu0 %v1640
    %1926 = vmatpush1.bf16.msra.mxu0 %v1639
    %1927 = vmatprep.subr.bf16.mxu0 %v1648
    %1928 = vmatpush1.bf16.msra.mxu0 %v1647
    %1929 = vmatprep.subr.bf16.mxu0 %v1656
    %1930 = vmatpush1.bf16.msra.mxu0 %v1655
    %1931 = vmatprep.subr.bf16.mxu0 %v1664
    %1932 = vmatpush1.bf16.msra.mxu0 %v1663
    %1933 = vmatprep.subr.bf16.mxu0 %v1672
    %1934 = vmatpush1.bf16.msra.mxu0 %v1671
    %1935 = vmatprep.subr.bf16.mxu0 %v1680
    %1936 = vmatpush1.bf16.msra.mxu0 %v1679
    %1937 = vmatprep.subr.bf16.mxu0 %v1688
    %1938 = vmatpush1.bf16.msra.mxu0 %v1687
    %1939 = vmatprep.subr.bf16.mxu0 %v1696
    %1940 = vmatpush1.bf16.msra.mxu0 %v1695
    %1941 = vmatprep.subr.bf16.mxu0 %v1704
    %1942 = vmatpush1.bf16.msra.mxu0 %v1703
    %1943 = vmatprep.subr.bf16.mxu0 %v1712
    %1944 = vmatpush1.bf16.msra.mxu0 %v1711
    %1945 = vmatprep.mubr.bf16.mxu0 %v1743
    %1946 = vmatmul.mubr.bf16.gmra.mrb[0].mxu0 %v1742
    %v1947 = vpop.f32.mrb[0].mxu0
    %v1948 = vpop.f32.mrb[0].mxu0
    %v1949 = vadd.f32 %v1735, %v1948
    %v1950 = vpop.f32.mrb[0].mxu0
    %v1951 = vpop.f32.mrb[0].mxu0
    %1952 = vdwg.mxu0
    %1953 = vmatprep.subr.bf16.mxu0 %v1720
    %1954 = vmatpush1.bf16.msra.mxu0 %v1719
    %1955 = vmatprep.subr.bf16.mxu0 %v1728
    %1956 = vmatpush1.bf16.msra.mxu0 %v1727
    %1957 = vmatprep.subr.bf16.mxu0 0
    %1958 = vmatpush1.bf16.msra.mxu0 0
    %1959 = vmatprep.subr.bf16.mxu0 0
    %1960 = vmatpush1.bf16.msra.mxu0 0
    %1961 = vmatprep.subr.bf16.mxu0 0
    %1962 = vmatpush1.bf16.msra.mxu0 0
    %1963 = vmatprep.subr.bf16.mxu0 0
    %1964 = vmatpush1.bf16.msra.mxu0 0
    %1965 = vmatprep.subr.bf16.mxu0 0
    %1966 = vmatpush1.bf16.msra.mxu0 0
    %1967 = vmatprep.subr.bf16.mxu0 0
    %1968 = vmatpush1.bf16.msra.mxu0 0
    %1969 = vmatprep.subr.bf16.mxu0 0
    %1970 = vmatpush1.bf16.msra.mxu0 0
    %1971 = vmatprep.subr.bf16.mxu0 0
    %1972 = vmatpush1.bf16.msra.mxu0 0
    %1973 = vmatprep.subr.bf16.mxu0 0
    %1974 = vmatpush1.bf16.msra.mxu0 0
    %1975 = vmatprep.subr.bf16.mxu0 0
    %1976 = vmatpush1.bf16.msra.mxu0 0
    %1977 = vmatprep.subr.bf16.mxu0 0
    %1978 = vmatpush1.bf16.msra.mxu0 0
    %1979 = vmatprep.subr.bf16.mxu0 0
    %1980 = vmatpush1.bf16.msra.mxu0 0
    %1981 = vmatprep.subr.bf16.mxu0 0
    %1982 = vmatpush1.bf16.msra.mxu0 0
    %1983 = vmatprep.subr.bf16.mxu0 0
    %1984 = vmatpush1.bf16.msra.mxu0 0
    %1985 = vmatprep.mubr.bf16.mxu0 0
    %1986 = vmatmul.mubr.bf16.gmra.mrb[0].mxu0 %v1749
    %v1987 = vpop.f32.mrb[0].mxu0
    %v1988 = vpop.f32.mrb[0].mxu0
    %v1989 = vadd.f32 %v1949, %v1988
    %v1990 = vpop.f32.mrb[0].mxu0
    %v1991 = vpop.f32.mrb[0].mxu0
    %1992 = vdwg.mxu0
    %1993 = vmatprep.subr.bf16.mxu0 %v1594
    %1994 = vmatpush1.bf16.msra.mxu0 %v1593
    %1995 = vmatprep.subr.bf16.mxu0 %v1602
    %1996 = vmatpush1.bf16.msra.mxu0 %v1601
    %1997 = vmatprep.subr.bf16.mxu0 %v1610
    %1998 = vmatpush1.bf16.msra.mxu0 %v1609
    %1999 = vmatprep.subr.bf16.mxu0 %v1618
    %2000 = vmatpush1.bf16.msra.mxu0 %v1617
    %2001 = vmatprep.subr.bf16.mxu0 %v1626
    %2002 = vmatpush1.bf16.msra.mxu0 %v1625
    %2003 = vmatprep.subr.bf16.mxu0 %v1634
    %2004 = vmatpush1.bf16.msra.mxu0 %v1633
    %2005 = vmatprep.subr.bf16.mxu0 %v1642
    %2006 = vmatpush1.bf16.msra.mxu0 %v1641
    %2007 = vmatprep.subr.bf16.mxu0 %v1650
    %2008 = vmatpush1.bf16.msra.mxu0 %v1649
    %2009 = vmatprep.subr.bf16.mxu0 %v1658
    %2010 = vmatpush1.bf16.msra.mxu0 %v1657
    %2011 = vmatprep.subr.bf16.mxu0 %v1666
    %2012 = vmatpush1.bf16.msra.mxu0 %v1665
    %2013 = vmatprep.subr.bf16.mxu0 %v1674
    %2014 = vmatpush1.bf16.msra.mxu0 %v1673
    %2015 = vmatprep.subr.bf16.mxu0 %v1682
    %2016 = vmatpush1.bf16.msra.mxu0 %v1681
    %2017 = vmatprep.subr.bf16.mxu0 %v1690
    %2018 = vmatpush1.bf16.msra.mxu0 %v1689
    %2019 = vmatprep.subr.bf16.mxu0 %v1698
    %2020 = vmatpush1.bf16.msra.mxu0 %v1697
    %2021 = vmatprep.subr.bf16.mxu0 %v1706
    %2022 = vmatpush1.bf16.msra.mxu0 %v1705
    %2023 = vmatprep.subr.bf16.mxu0 %v1714
    %2024 = vmatpush1.bf16.msra.mxu0 %v1713
    %2025 = vmatprep.mubr.bf16.mxu0 %v1743
    %2026 = vmatmul.mubr.bf16.gmra.mrb[0].mxu0 %v1742
    %v2027 = vpop.f32.mrb[0].mxu0
    %v2028 = vadd.f32 %v1735, %v2027
    %v2029 = vpop.f32.mrb[0].mxu0
    %v2030 = vadd.f32 %v1735, %v2029
    %v2031 = vpop.f32.mrb[0].mxu0
    %v2032 = vpop.f32.mrb[0].mxu0
    %2033 = vdwg.mxu0
    %2034 = vmatprep.subr.bf16.mxu0 %v1722
    %2035 = vmatpush1.bf16.msra.mxu0 %v1721
    %2036 = vmatprep.subr.bf16.mxu0 %v1730
    %2037 = vmatpush1.bf16.msra.mxu0 %v1729
    %2038 = vmatprep.subr.bf16.mxu0 0
    %2039 = vmatpush1.bf16.msra.mxu0 0
    %2040 = vmatprep.subr.bf16.mxu0 0
    %2041 = vmatpush1.bf16.msra.mxu0 0
    %2042 = vmatprep.subr.bf16.mxu0 0
    %2043 = vmatpush1.bf16.msra.mxu0 0
    %2044 = vmatprep.subr.bf16.mxu0 0
    %2045 = vmatpush1.bf16.msra.mxu0 0
    %2046 = vmatprep.subr.bf16.mxu0 0
    %2047 = vmatpush1.bf16.msra.mxu0 0
    %2048 = vmatprep.subr.bf16.mxu0 0
    %2049 = vmatpush1.bf16.msra.mxu0 0
    %2050 = vmatprep.subr.bf16.mxu0 0
    %2051 = vmatpush1.bf16.msra.mxu0 0
    %2052 = vmatprep.subr.bf16.mxu0 0
    %2053 = vmatpush1.bf16.msra.mxu0 0
    %2054 = vmatprep.subr.bf16.mxu0 0
    %2055 = vmatpush1.bf16.msra.mxu0 0
    %2056 = vmatprep.subr.bf16.mxu0 0
    %2057 = vmatpush1.bf16.msra.mxu0 0
    %2058 = vmatprep.subr.bf16.mxu0 0
    %2059 = vmatpush1.bf16.msra.mxu0 0
    %2060 = vmatprep.subr.bf16.mxu0 0
    %2061 = vmatpush1.bf16.msra.mxu0 0
    %2062 = vmatprep.subr.bf16.mxu0 0
    %2063 = vmatpush1.bf16.msra.mxu0 0
    %2064 = vmatprep.subr.bf16.mxu0 0
    %2065 = vmatpush1.bf16.msra.mxu0 0
    %2066 = vmatprep.mubr.bf16.mxu0 0
    %2067 = vmatmul.mubr.bf16.gmra.mrb[0].mxu0 %v1749
    %v2068 = vpop.f32.mrb[0].mxu0
    %v2069 = vadd.f32 %v2028, %v2068
    %v2070 = vpop.f32.mrb[0].mxu0
    %v2071 = vadd.f32 %v2030, %v2070
    %v2072 = vpop.f32.mrb[0].mxu0
    %v2073 = vpop.f32.mrb[0].mxu0
    %2074 = vdwg.mxu0
    %v2075 = vmax.f32 %v1827, 0.0
    %v2076 = vmax.f32 %v1829, 0.0
    %v2077 = vmax.f32 %v1908, 0.0
    %v2078 = vmax.f32 %v1989, 0.0
    %v2079 = vmax.f32 %v2069, 0.0
    %v2080 = vmax.f32 %v2071, 0.0
    %v2081 = vld [vmem:[%s5] sm:$0xff]
    %v2083 = vlaneseq
    %v2084 = vshrl.u32 %v2083, 7
    %v2085 = vsub.s32 0, %v2084
    %v2086 = vrot.slane %v2081, %v2085
    %v2087 = vlaneseq
    %v2088 = vshrl.u32 %v2087, 7
    %v2089 = vsub.s32 1, %v2088
    %v2090 = vrot.slane %v2081, %v2089
    %v2091 = vlaneseq
    %v2092 = vshrl.u32 %v2091, 7
    %v2093 = vsub.s32 2, %v2092
    %v2094 = vrot.slane %v2081, %v2093
    %v2095 = vlaneseq
    %v2096 = vshrl.u32 %v2095, 7
    %v2097 = vsub.s32 5, %v2096
    %v2098 = vrot.slane %v2081, %v2097
    %v2099 = vlaneseq
    %v2100 = vshrl.u32 %v2099, 7
    %v2101 = vsub.s32 6, %v2100
    %v2102 = vrot.slane %v2081, %v2101
    %v2103 = vlaneseq
    %v2104 = vshrl.u32 %v2103, 7
    %v2105 = vsub.s32 7, %v2104
    %v2106 = vrot.slane %v2081, %v2105
    %v2113 = vmul.f32 %v2075, %v2086
    %v2114 = vmul.f32 %v2076, %v2090
    %v2115 = vmul.f32 %v2077, %v2094
    %v2116 = vmul.f32 %v2078, %v2098
    %v2117 = vmul.f32 %v2079, %v2102
    %v2118 = vmul.f32 %v2080, %v2106
    %2119 = vst [vmem:[#allocation3] sm:$0xff] 0.0
    %2120 = vst [vmem:[#allocation3 + $0x8] sm:$0xff] %v2113
    %2121 = vst [vmem:[#allocation3 + $0x10] sm:$0xff] %v2114
    %2122 = vst [vmem:[#allocation3 + $0x18] sm:$0xff] %v2115
    %2123 = vst [vmem:[#allocation3 + $0x20] sm:$0xff] 0.0
    %2124 = vst [vmem:[#allocation3 + $0x28] sm:$0xff] 0.0
    %2125 = vst [vmem:[#allocation3 + $0x30] sm:$0xff] %v2116
    %2126 = vst [vmem:[#allocation3 + $0x38] sm:$0xff] %v2117
    %2127 = vst [vmem:[#allocation3 + $0x40] sm:$0xff] %v2118
    %2128 = vst [vmem:[#allocation3 + $0x48] sm:$0xff] 0.0
    %v2129 = vld [vmem:[%s3] sm:$0xff]
    %v2130 = vld [vmem:[#allocation3] sm:$0xff]
    %v2131 = vld [vmem:[#allocation3 + $0x8] sm:$0xff]
    %v2132 = vld [vmem:[#allocation3 + $0x10] sm:$0xff]
    %v2133 = vld [vmem:[#allocation3 + $0x18] sm:$0xff]
    %v2134 = vld [vmem:[#allocation3 + $0x28] sm:$0xff]
    %v2135 = vld [vmem:[#allocation3 + $0x30] sm:$0xff]
    %v2136 = vld [vmem:[#allocation3 + $0x38] sm:$0xff]
    %v2137 = vld [vmem:[#allocation3 + $0x40] sm:$0xff]
    %2139 = vset.pattern.permute.xlu0 0
    %2140 = vperm.xlu0 %2139, %v2129
    %v2141 = vpop.permute.xlu0 %2140
    %v2143 = vmul.f32 %v2141, %v2130
    %v2144 = vmul.f32 %v2141, %v2131
    %v2145 = vmul.f32 %v2141, %v2132
    %v2146 = vmul.f32 %v2141, %v2133
    %v2147 = vmul.f32 %v2141, %v2134
    %v2148 = vmul.f32 %v2141, %v2135
    %v2149 = vmul.f32 %v2141, %v2136
    %v2150 = vmul.f32 %v2141, %v2137
    %v2151 = vadd.f32 %v2143, 0.0
    %v2152 = vadd.f32 %v2144, 0.0
    %v2153 = vadd.f32 %v2145, 0.0
    %v2154 = vadd.f32 %v2146, 0.0
    %v2155 = vadd.f32 %v2147, 0.0
    %v2156 = vadd.f32 %v2148, 0.0
    %v2157 = vadd.f32 %v2149, 0.0
    %v2158 = vadd.f32 %v2150, 0.0
    %s2159 = scalar_lea.vmem %s3, 8
    %v2160 = vld [vmem:[%s2159] sm:$0xff]
    %v2161 = vld [vmem:[#allocation3 + $0x20] sm:$0xff]
    %2163 = vset.pattern.permute.xlu0 0
    %2164 = vperm.xlu0 %2163, %v2160
    %v2165 = vpop.permute.xlu0 %2164
    %v2167 = vmul.f32 %v2165, %v2130
    %v2168 = vmul.f32 %v2165, %v2131
    %v2169 = vmul.f32 %v2165, %v2132
    %v2170 = vmul.f32 %v2165, %v2133
    %v2171 = vmul.f32 %v2165, %v2161
    %v2172 = vmul.f32 %v2165, %v2134
    %v2173 = vmul.f32 %v2165, %v2135
    %v2174 = vmul.f32 %v2165, %v2136
    %v2175 = vmul.f32 %v2165, %v2137
    %2185 = vrot.lane.b32.xlu0 %v2167, 127
    %v2186 = vpop.permute.xlu0 %2185
    %2187 = vrot.lane.b32.xlu0 %v2168, 127
    %v2188 = vpop.permute.xlu0 %2187
    %2189 = vrot.lane.b32.xlu0 %v2169, 127
    %v2190 = vpop.permute.xlu0 %2189
    %2191 = vrot.lane.b32.xlu0 %v2170, 127
    %v2192 = vpop.permute.xlu0 %2191
    %2193 = vrot.lane.b32.xlu0 %v2171, 127
    %v2194 = vpop.permute.xlu0 %2193
    %2195 = vrot.lane.b32.xlu0 %v2172, 127
    %v2196 = vpop.permute.xlu0 %2195
    %2197 = vrot.lane.b32.xlu0 %v2173, 127
    %v2198 = vpop.permute.xlu0 %2197
    %2199 = vrot.lane.b32.xlu0 %v2174, 127
    %v2200 = vpop.permute.xlu0 %2199
    %2201 = vrot.lane.b32.xlu0 %v2175, 127
    %v2202 = vpop.permute.xlu0 %2201
    %vm2203 = vcmask 1039360
    %v2204 = vsel %vm2203, %v2186, %v2188
    %v2205 = vsel %vm2203, %v2188, %v2190
    %v2206 = vsel %vm2203, %v2190, %v2192
    %v2207 = vsel %vm2203, %v2192, %v2194
    %v2208 = vsel %vm2203, %v2196, %v2198
    %v2209 = vsel %vm2203, %v2198, %v2200
    %v2210 = vsel %vm2203, %v2200, %v2202
    %v2219 = vadd.f32 %v2151, %v2204
    %v2220 = vadd.f32 %v2152, %v2205
    %v2221 = vadd.f32 %v2153, %v2206
    %v2222 = vadd.f32 %v2154, %v2207
    %v2223 = vadd.f32 %v2155, %v2208
    %v2224 = vadd.f32 %v2156, %v2209
    %v2225 = vadd.f32 %v2157, %v2210
    %v2226 = vadd.f32 %v2158, %v2202
    %s2227 = scalar_lea.vmem %s3, 16
    %v2228 = vld [vmem:[%s2227] sm:$0xff]
    %2230 = vset.pattern.permute.xlu0 0
    %2231 = vperm.xlu0 %2230, %v2228
    %v2232 = vpop.permute.xlu0 %2231
    %v2234 = vmul.f32 %v2232, %v2130
    %v2235 = vmul.f32 %v2232, %v2131
    %v2236 = vmul.f32 %v2232, %v2132
    %v2237 = vmul.f32 %v2232, %v2133
    %v2238 = vmul.f32 %v2232, %v2161
    %v2239 = vmul.f32 %v2232, %v2134
    %v2240 = vmul.f32 %v2232, %v2135
    %v2241 = vmul.f32 %v2232, %v2136
    %v2242 = vmul.f32 %v2232, %v2137
    %2252 = vrot.lane.b32.xlu0 %v2234, 126
    %v2253 = vpop.permute.xlu0 %2252
    %2254 = vrot.lane.b32.xlu0 %v2235, 126
    %v2255 = vpop.permute.xlu0 %2254
    %2256 = vrot.lane.b32.xlu0 %v2236, 126
    %v2257 = vpop.permute.xlu0 %2256
    %2258 = vrot.lane.b32.xlu0 %v2237, 126
    %v2259 = vpop.permute.xlu0 %2258
    %2260 = vrot.lane.b32.xlu0 %v2238, 126
    %v2261 = vpop.permute.xlu0 %2260
    %2262 = vrot.lane.b32.xlu0 %v2239, 126
    %v2263 = vpop.permute.xlu0 %2262
    %2264 = vrot.lane.b32.xlu0 %v2240, 126
    %v2265 = vpop.permute.xlu0 %2264
    %2266 = vrot.lane.b32.xlu0 %v2241, 126
    %v2267 = vpop.permute.xlu0 %2266
    %2268 = vrot.lane.b32.xlu0 %v2242, 126
    %v2269 = vpop.permute.xlu0 %2268
    %vm2270 = vcmask 1031168
    %v2271 = vsel %vm2270, %v2253, %v2255
    %v2272 = vsel %vm2270, %v2255, %v2257
    %v2273 = vsel %vm2270, %v2257, %v2259
    %v2274 = vsel %vm2270, %v2259, %v2261
    %v2275 = vsel %vm2270, %v2263, %v2265
    %v2276 = vsel %vm2270, %v2265, %v2267
    %v2277 = vsel %vm2270, %v2267, %v2269
    %v2286 = vadd.f32 %v2219, %v2271
    %v2287 = vadd.f32 %v2220, %v2272
    %v2288 = vadd.f32 %v2221, %v2273
    %v2289 = vadd.f32 %v2222, %v2274
    %v2290 = vadd.f32 %v2223, %v2275
    %v2291 = vadd.f32 %v2224, %v2276
    %v2292 = vadd.f32 %v2225, %v2277
    %v2293 = vadd.f32 %v2226, %v2269
    %s2294 = scalar_lea.vmem %s3, 24
    %v2295 = vld [vmem:[%s2294] sm:$0xff]
    %2297 = vset.pattern.permute.xlu0 0
    %2298 = vperm.xlu0 %2297, %v2295
    %v2299 = vpop.permute.xlu0 %2298
    %v2301 = vmul.f32 %v2299, %v2130
    %v2302 = vmul.f32 %v2299, %v2131
    %v2303 = vmul.f32 %v2299, %v2132
    %v2304 = vmul.f32 %v2299, %v2133
    %v2305 = vmul.f32 %v2299, %v2161
    %v2306 = vmul.f32 %v2299, %v2134
    %v2307 = vmul.f32 %v2299, %v2135
    %v2308 = vmul.f32 %v2299, %v2136
    %v2309 = vmul.f32 %v2299, %v2137
    %2319 = vrot.lane.b32.xlu0 %v2301, 110
    %v2320 = vpop.permute.xlu0 %2319
    %2321 = vrot.lane.b32.xlu0 %v2302, 110
    %v2322 = vpop.permute.xlu0 %2321
    %2323 = vrot.lane.b32.xlu0 %v2303, 110
    %v2324 = vpop.permute.xlu0 %2323
    %2325 = vrot.lane.b32.xlu0 %v2304, 110
    %v2326 = vpop.permute.xlu0 %2325
    %2327 = vrot.lane.b32.xlu0 %v2305, 110
    %v2328 = vpop.permute.xlu0 %2327
    %2329 = vrot.lane.b32.xlu0 %v2306, 110
    %v2330 = vpop.permute.xlu0 %2329
    %2331 = vrot.lane.b32.xlu0 %v2307, 110
    %v2332 = vpop.permute.xlu0 %2331
    %2333 = vrot.lane.b32.xlu0 %v2308, 110
    %v2334 = vpop.permute.xlu0 %2333
    %2335 = vrot.lane.b32.xlu0 %v2309, 110
    %v2336 = vpop.permute.xlu0 %2335
    %vm2337 = vcmask 900096
    %v2338 = vsel %vm2337, %v2320, %v2322
    %v2339 = vsel %vm2337, %v2322, %v2324
    %v2340 = vsel %vm2337, %v2324, %v2326
    %v2341 = vsel %vm2337, %v2326, %v2328
    %v2342 = vsel %vm2337, %v2330, %v2332
    %v2343 = vsel %vm2337, %v2332, %v2334
    %v2344 = vsel %vm2337, %v2334, %v2336
    %v2353 = vadd.f32 %v2286, %v2338
    %v2354 = vadd.f32 %v2287, %v2339
    %v2355 = vadd.f32 %v2288, %v2340
    %v2356 = vadd.f32 %v2289, %v2341
    %v2357 = vadd.f32 %v2290, %v2342
    %v2358 = vadd.f32 %v2291, %v2343
    %v2359 = vadd.f32 %v2292, %v2344
    %v2360 = vadd.f32 %v2293, %v2336
    %s2361 = scalar_lea.vmem %s3, 32
    %v2362 = vld [vmem:[%s2361] sm:$0xff]
    %2364 = vset.pattern.permute.xlu0 0
    %2365 = vperm.xlu0 %2364, %v2362
    %v2366 = vpop.permute.xlu0 %2365
    %v2368 = vmul.f32 %v2366, %v2131
    %v2369 = vmul.f32 %v2366, %v2132
    %v2370 = vmul.f32 %v2366, %v2133
    %v2371 = vmul.f32 %v2366, %v2161
    %v2372 = vmul.f32 %v2366, %v2134
    %v2373 = vmul.f32 %v2366, %v2135
    %v2374 = vmul.f32 %v2366, %v2136
    %v2375 = vmul.f32 %v2366, %v2137
    %2384 = vrot.lane.b32.xlu0 %v2368, 109
    %v2385 = vpop.permute.xlu0 %2384
    %2386 = vrot.lane.b32.xlu0 %v2369, 109
    %v2387 = vpop.permute.xlu0 %2386
    %2388 = vrot.lane.b32.xlu0 %v2370, 109
    %v2389 = vpop.permute.xlu0 %2388
    %2390 = vrot.lane.b32.xlu0 %v2371, 109
    %v2391 = vpop.permute.xlu0 %2390
    %2392 = vrot.lane.b32.xlu0 %v2372, 109
    %v2393 = vpop.permute.xlu0 %2392
    %2394 = vrot.lane.b32.xlu0 %v2373, 109
    %v2395 = vpop.permute.xlu0 %2394
    %2396 = vrot.lane.b32.xlu0 %v2374, 109
    %v2397 = vpop.permute.xlu0 %2396
    %2398 = vrot.lane.b32.xlu0 %v2375, 109
    %v2399 = vpop.permute.xlu0 %2398
    %vm2400 = vcmask 891904
    %v2401 = vsel %vm2400, %v2385, %v2387
    %v2402 = vsel %vm2400, %v2387, %v2389
    %v2403 = vsel %vm2400, %v2389, %v2391
    %v2404 = vsel %vm2400, %v2393, %v2395
    %v2405 = vsel %vm2400, %v2395, %v2397
    %v2406 = vsel %vm2400, %v2397, %v2399
    %v2415 = vadd.f32 %v2353, %v2385
    %v2416 = vadd.f32 %v2354, %v2401
    %v2417 = vadd.f32 %v2355, %v2402
    %v2418 = vadd.f32 %v2356, %v2403
    %v2419 = vadd.f32 %v2357, %v2404
    %v2420 = vadd.f32 %v2358, %v2405
    %v2421 = vadd.f32 %v2359, %v2406
    %v2422 = vadd.f32 %v2360, %v2399
    %s2423 = scalar_lea.vmem %s3, 40
    %v2424 = vld [vmem:[%s2423] sm:$0xff]
    %v2425 = vld [vmem:[#allocation3 + $0x8] sm:$0xff]
    %v2426 = vld [vmem:[#allocation3 + $0x10] sm:$0xff]
    %v2427 = vld [vmem:[#allocation3 + $0x18] sm:$0xff]
    %v2428 = vld [vmem:[#allocation3 + $0x20] sm:$0xff]
    %v2429 = vld [vmem:[#allocation3 + $0x28] sm:$0xff]
    %v2430 = vld [vmem:[#allocation3 + $0x30] sm:$0xff]
    %v2431 = vld [vmem:[#allocation3 + $0x38] sm:$0xff]
    %v2432 = vld [vmem:[#allocation3 + $0x40] sm:$0xff]
    %v2433 = vld [vmem:[#allocation3 + $0x48] sm:$0xff]
    %2435 = vset.pattern.permute.xlu0 0
    %2436 = vperm.xlu0 %2435, %v2424
    %v2437 = vpop.permute.xlu0 %2436
    %v2439 = vmul.f32 %v2437, %v2425
    %v2440 = vmul.f32 %v2437, %v2426
    %v2441 = vmul.f32 %v2437, %v2427
    %v2442 = vmul.f32 %v2437, %v2428
    %v2443 = vmul.f32 %v2437, %v2429
    %v2444 = vmul.f32 %v2437, %v2430
    %v2445 = vmul.f32 %v2437, %v2431
    %v2446 = vmul.f32 %v2437, %v2432
    %v2447 = vmul.f32 %v2437, %v2433
    %2457 = vrot.lane.b32.xlu0 %v2439, 108
    %v2458 = vpop.permute.xlu0 %2457
    %2459 = vrot.lane.b32.xlu0 %v2440, 108
    %v2460 = vpop.permute.xlu0 %2459
    %2461 = vrot.lane.b32.xlu0 %v2441, 108
    %v2462 = vpop.permute.xlu0 %2461
    %2463 = vrot.lane.b32.xlu0 %v2442, 108
    %v2464 = vpop.permute.xlu0 %2463
    %2465 = vrot.lane.b32.xlu0 %v2443, 108
    %v2466 = vpop.permute.xlu0 %2465
    %2467 = vrot.lane.b32.xlu0 %v2444, 108
    %v2468 = vpop.permute.xlu0 %2467
    %2469 = vrot.lane.b32.xlu0 %v2445, 108
    %v2470 = vpop.permute.xlu0 %2469
    %2471 = vrot.lane.b32.xlu0 %v2446, 108
    %v2472 = vpop.permute.xlu0 %2471
    %2473 = vrot.lane.b32.xlu0 %v2447, 108
    %v2474 = vpop.permute.xlu0 %2473
    %vm2475 = vcmask 883712
    %v2476 = vsel %vm2475, %v2458, %v2460
    %v2477 = vsel %vm2475, %v2460, %v2462
    %v2478 = vsel %vm2475, %v2462, %v2464
    %v2479 = vsel %vm2475, %v2466, %v2468
    %v2480 = vsel %vm2475, %v2468, %v2470
    %v2481 = vsel %vm2475, %v2470, %v2472
    %v2482 = vsel %vm2475, %v2472, %v2474
    %v2491 = vadd.f32 %v2415, %v2458
    %v2492 = vadd.f32 %v2416, %v2476
    %v2493 = vadd.f32 %v2417, %v2477
    %v2494 = vadd.f32 %v2418, %v2478
    %v2495 = vadd.f32 %v2419, %v2479
    %v2496 = vadd.f32 %v2420, %v2480
    %v2497 = vadd.f32 %v2421, %v2481
    %v2498 = vadd.f32 %v2422, %v2482
    %s2499 = scalar_lea.vmem %s3, 48
    %v2500 = vld [vmem:[%s2499] sm:$0xff]
    %2502 = vset.pattern.permute.xlu0 0
    %2503 = vperm.xlu0 %2502, %v2500
    %v2504 = vpop.permute.xlu0 %2503
    %v2506 = vmul.f32 %v2504, %v2425
    %v2507 = vmul.f32 %v2504, %v2426
    %v2508 = vmul.f32 %v2504, %v2427
    %v2509 = vmul.f32 %v2504, %v2428
    %v2510 = vmul.f32 %v2504, %v2429
    %v2511 = vmul.f32 %v2504, %v2430
    %v2512 = vmul.f32 %v2504, %v2431
    %v2513 = vmul.f32 %v2504, %v2432
    %v2514 = vmul.f32 %v2504, %v2433
    %2524 = vrot.lane.b32.xlu0 %v2506, 92
    %v2525 = vpop.permute.xlu0 %2524
    %2526 = vrot.lane.b32.xlu0 %v2507, 92
    %v2527 = vpop.permute.xlu0 %2526
    %2528 = vrot.lane.b32.xlu0 %v2508, 92
    %v2529 = vpop.permute.xlu0 %2528
    %2530 = vrot.lane.b32.xlu0 %v2509, 92
    %v2531 = vpop.permute.xlu0 %2530
    %2532 = vrot.lane.b32.xlu0 %v2510, 92
    %v2533 = vpop.permute.xlu0 %2532
    %2534 = vrot.lane.b32.xlu0 %v2511, 92
    %v2535 = vpop.permute.xlu0 %2534
    %2536 = vrot.lane.b32.xlu0 %v2512, 92
    %v2537 = vpop.permute.xlu0 %2536
    %2538 = vrot.lane.b32.xlu0 %v2513, 92
    %v2539 = vpop.permute.xlu0 %2538
    %2540 = vrot.lane.b32.xlu0 %v2514, 92
    %v2541 = vpop.permute.xlu0 %2540
    %vm2542 = vcmask 752640
    %v2543 = vsel %vm2542, %v2525, %v2527
    %v2544 = vsel %vm2542, %v2527, %v2529
    %v2545 = vsel %vm2542, %v2529, %v2531
    %v2546 = vsel %vm2542, %v2533, %v2535
    %v2547 = vsel %vm2542, %v2535, %v2537
    %v2548 = vsel %vm2542, %v2537, %v2539
    %v2549 = vsel %vm2542, %v2539, %v2541
    %v2558 = vadd.f32 %v2491, %v2525
    %v2559 = vadd.f32 %v2492, %v2543
    %v2560 = vadd.f32 %v2493, %v2544
    %v2561 = vadd.f32 %v2494, %v2545
    %v2562 = vadd.f32 %v2495, %v2546
    %v2563 = vadd.f32 %v2496, %v2547
    %v2564 = vadd.f32 %v2497, %v2548
    %v2565 = vadd.f32 %v2498, %v2549
    %s2566 = scalar_lea.vmem %s3, 56
    %v2567 = vld [vmem:[%s2566] sm:$0xff]
    %2569 = vset.pattern.permute.xlu0 0
    %2570 = vperm.xlu0 %2569, %v2567
    %v2571 = vpop.permute.xlu0 %2570
    %v2573 = vmul.f32 %v2571, %v2425
    %v2574 = vmul.f32 %v2571, %v2426
    %v2575 = vmul.f32 %v2571, %v2427
    %v2576 = vmul.f32 %v2571, %v2428
    %v2577 = vmul.f32 %v2571, %v2429
    %v2578 = vmul.f32 %v2571, %v2430
    %v2579 = vmul.f32 %v2571, %v2431
    %v2580 = vmul.f32 %v2571, %v2432
    %v2581 = vmul.f32 %v2571, %v2433
    %2591 = vrot.lane.b32.xlu0 %v2573, 91
    %v2592 = vpop.permute.xlu0 %2591
    %2593 = vrot.lane.b32.xlu0 %v2574, 91
    %v2594 = vpop.permute.xlu0 %2593
    %2595 = vrot.lane.b32.xlu0 %v2575, 91
    %v2596 = vpop.permute.xlu0 %2595
    %2597 = vrot.lane.b32.xlu0 %v2576, 91
    %v2598 = vpop.permute.xlu0 %2597
    %2599 = vrot.lane.b32.xlu0 %v2577, 91
    %v2600 = vpop.permute.xlu0 %2599
    %2601 = vrot.lane.b32.xlu0 %v2578, 91
    %v2602 = vpop.permute.xlu0 %2601
    %2603 = vrot.lane.b32.xlu0 %v2579, 91
    %v2604 = vpop.permute.xlu0 %2603
    %2605 = vrot.lane.b32.xlu0 %v2580, 91
    %v2606 = vpop.permute.xlu0 %2605
    %2607 = vrot.lane.b32.xlu0 %v2581, 91
    %v2608 = vpop.permute.xlu0 %2607
    %vm2609 = vcmask 744448
    %v2610 = vsel %vm2609, %v2592, %v2594
    %v2611 = vsel %vm2609, %v2594, %v2596
    %v2612 = vsel %vm2609, %v2596, %v2598
    %v2613 = vsel %vm2609, %v2600, %v2602
    %v2614 = vsel %vm2609, %v2602, %v2604
    %v2615 = vsel %vm2609, %v2604, %v2606
    %v2616 = vsel %vm2609, %v2606, %v2608
    %v2625 = vadd.f32 %v2558, %v2592
    %v2626 = vadd.f32 %v2559, %v2610
    %v2627 = vadd.f32 %v2560, %v2611
    %v2628 = vadd.f32 %v2561, %v2612
    %v2629 = vadd.f32 %v2562, %v2613
    %v2630 = vadd.f32 %v2563, %v2614
    %v2631 = vadd.f32 %v2564, %v2615
    %v2632 = vadd.f32 %v2565, %v2616
    %s2633 = scalar_lea.vmem %s3, 64
    %v2634 = vld [vmem:[%s2633] sm:$0xff]
    %2636 = vset.pattern.permute.xlu0 0
    %2637 = vperm.xlu0 %2636, %v2634
    %v2638 = vpop.permute.xlu0 %2637
    %v2640 = vmul.f32 %v2638, %v2425
    %v2641 = vmul.f32 %v2638, %v2426
    %v2642 = vmul.f32 %v2638, %v2427
    %v2643 = vmul.f32 %v2638, %v2428
    %v2644 = vmul.f32 %v2638, %v2429
    %v2645 = vmul.f32 %v2638, %v2430
    %v2646 = vmul.f32 %v2638, %v2431
    %v2647 = vmul.f32 %v2638, %v2432
    %v2648 = vmul.f32 %v2638, %v2433
    %2658 = vrot.lane.b32.xlu0 %v2640, 90
    %v2659 = vpop.permute.xlu0 %2658
    %2660 = vrot.lane.b32.xlu0 %v2641, 90
    %v2661 = vpop.permute.xlu0 %2660
    %2662 = vrot.lane.b32.xlu0 %v2642, 90
    %v2663 = vpop.permute.xlu0 %2662
    %2664 = vrot.lane.b32.xlu0 %v2643, 90
    %v2665 = vpop.permute.xlu0 %2664
    %2666 = vrot.lane.b32.xlu0 %v2644, 90
    %v2667 = vpop.permute.xlu0 %2666
    %2668 = vrot.lane.b32.xlu0 %v2645, 90
    %v2669 = vpop.permute.xlu0 %2668
    %2670 = vrot.lane.b32.xlu0 %v2646, 90
    %v2671 = vpop.permute.xlu0 %2670
    %2672 = vrot.lane.b32.xlu0 %v2647, 90
    %v2673 = vpop.permute.xlu0 %2672
    %2674 = vrot.lane.b32.xlu0 %v2648, 90
    %v2675 = vpop.permute.xlu0 %2674
    %vm2676 = vcmask 736256
    %v2677 = vsel %vm2676, %v2659, %v2661
    %v2678 = vsel %vm2676, %v2661, %v2663
    %v2679 = vsel %vm2676, %v2663, %v2665
    %v2680 = vsel %vm2676, %v2667, %v2669
    %v2681 = vsel %vm2676, %v2669, %v2671
    %v2682 = vsel %vm2676, %v2671, %v2673
    %v2683 = vsel %vm2676, %v2673, %v2675
    %v2692 = vadd.f32 %v2625, %v2659
    %v2693 = vadd.f32 %v2626, %v2677
    %v2694 = vadd.f32 %v2627, %v2678
    %v2695 = vadd.f32 %v2628, %v2679
    %v2696 = vadd.f32 %v2629, %v2680
    %v2697 = vadd.f32 %v2630, %v2681
    %v2698 = vadd.f32 %v2631, %v2682
    %v2699 = vadd.f32 %v2632, %v2683
    %vm2700 = vcmask 1048424
    %v2701 = vsel %vm2700, %v2692, 0.0
    %v2702 = vrot.slane %v2701, 4
    %v2703 = vadd.f32 %v2701, %v2702
    %v2704 = vrot.slane %v2703, 2
    %v2705 = vadd.f32 %v2703, %v2704
    %v2706 = vrot.slane %v2705, 1
    %v2707 = vadd.f32 %v2705, %v2706
    %v2708 = vrot.slane %v2693, 4
    %v2709 = vadd.f32 %v2693, %v2708
    %v2710 = vrot.slane %v2709, 2
    %v2711 = vadd.f32 %v2709, %v2710
    %v2712 = vrot.slane %v2711, 1
    %v2713 = vadd.f32 %v2711, %v2712
    %v2714 = vrot.slane %v2694, 4
    %v2715 = vadd.f32 %v2694, %v2714
    %v2716 = vrot.slane %v2715, 2
    %v2717 = vadd.f32 %v2715, %v2716
    %v2718 = vrot.slane %v2717, 1
    %v2719 = vadd.f32 %v2717, %v2718
    %v2720 = vrot.slane %v2695, 4
    %v2721 = vadd.f32 %v2695, %v2720
    %v2722 = vrot.slane %v2721, 2
    %v2723 = vadd.f32 %v2721, %v2722
    %v2724 = vrot.slane %v2723, 1
    %v2725 = vadd.f32 %v2723, %v2724
    %v2726 = vrot.slane %v2696, 4
    %v2727 = vadd.f32 %v2696, %v2726
    %v2728 = vrot.slane %v2727, 2
    %v2729 = vadd.f32 %v2727, %v2728
    %v2730 = vrot.slane %v2729, 1
    %v2731 = vadd.f32 %v2729, %v2730
    %v2732 = vrot.slane %v2697, 4
    %v2733 = vadd.f32 %v2697, %v2732
    %v2734 = vrot.slane %v2733, 2
    %v2735 = vadd.f32 %v2733, %v2734
    %v2736 = vrot.slane %v2735, 1
    %v2737 = vadd.f32 %v2735, %v2736
    %v2738 = vrot.slane %v2698, 4
    %v2739 = vadd.f32 %v2698, %v2738
    %v2740 = vrot.slane %v2739, 2
    %v2741 = vadd.f32 %v2739, %v2740
    %v2742 = vrot.slane %v2741, 1
    %v2743 = vadd.f32 %v2741, %v2742
    %v2744 = vsel %vm2400, %v2699, 0.0
    %v2745 = vrot.slane %v2744, 4
    %v2746 = vadd.f32 %v2744, %v2745
    %v2747 = vrot.slane %v2746, 2
    %v2748 = vadd.f32 %v2746, %v2747
    %v2749 = vrot.slane %v2748, 1
    %v2750 = vadd.f32 %v2748, %v2749
    %v2751 = vld [vmem:[#allocation4] sm:$0x1]
    %2753 = vset.pattern.permute.xlu0 0
    %2754 = vperm.xlu0 %2753, %v2751
    %v2755 = vpop.permute.xlu0 %2754
    %v2757 = vlaneseq
    %v2758 = vshrl.u32 %v2757, 7
    %v2759 = vsub.s32 0, %v2758
    %v2760 = vrot.slane %v2755, %v2759
    %v2761 = vadd.f32 %v2707, %v2760
    %v2762 = vadd.f32 %v2713, %v2760
    %v2763 = vadd.f32 %v2719, %v2760
    %v2764 = vadd.f32 %v2725, %v2760
    %v2765 = vadd.f32 %v2731, %v2760
    %v2766 = vadd.f32 %v2737, %v2760
    %v2767 = vadd.f32 %v2743, %v2760
    %v2768 = vadd.f32 %v2750, %v2760
    %v2769 = vmax.f32 %v2761, 0.0
    %v2770 = vmax.f32 %v2762, 0.0
    %v2771 = vmax.f32 %v2763, 0.0
    %v2772 = vmax.f32 %v2764, 0.0
    %v2773 = vmax.f32 %v2765, 0.0
    %v2774 = vmax.f32 %v2766, 0.0
    %v2775 = vmax.f32 %v2767, 0.0
    %v2776 = vmax.f32 %v2768, 0.0
    %v2781 = vcombine.low %v2769, %v2770
    %v2782 = vcombine.low %v2771, %v2772
    %v2784 = vunpack.c.l.s4 1966171168
    %v2785 = vunpack.c.0.s8 %v2784
    %v2786 = vlaneseq
    %v2787 = vshrl.u32 %v2786, 7
    %v2788 = vsub.s32 %v2785, %v2787
    %v2789 = vrot.slane %v2781, %v2788
    %v2791 = vunpack.c.l.s4 1966171168
    %v2792 = vunpack.c.0.s8 %v2791
    %v2793 = vlaneseq
    %v2794 = vshrl.u32 %v2793, 7
    %v2795 = vsub.s32 %v2792, %v2794
    %v2796 = vrot.slane %v2782, %v2795
    %v2797 = vcombine.low %v2789, %v2796
    %v2799 = vunpack.c.l.s4 1966171168
    %v2800 = vunpack.c.0.s8 %v2799
    %v2801 = vlaneseq
    %v2802 = vshrl.u32 %v2801, 7
    %v2803 = vsub.s32 %v2800, %v2802
    %v2804 = vrot.slane %v2797, %v2803
    %2805 = vrot.lane.b32.xlu0 %v2804, 19
    %v2806 = vpop.permute.xlu0 %2805
    %v2807 = vrot.slane %v2806, 1
    %vm2808 = vcmask 154624
    %v2809 = vsel %vm2808, %v2806, %v2807
    %v2811 = vlaneseq
    %vm2812 = vcmp.ge.s32.totalorder %v2811, 0
    %vm2813 = vcmp.lt.s32.totalorder %v2811, 384
    %vm2814 = vmand %vm2812, %vm2813
    %2815 = vst.msk [vmem:[#allocation8] sm:$0x7] %vm2814, %v2809
    %v2820 = vcombine.low %v2773, %v2774
    %v2821 = vcombine.low %v2775, %v2776
    %v2823 = vunpack.c.l.s4 1966171168
    %v2824 = vunpack.c.0.s8 %v2823
    %v2825 = vlaneseq
    %v2826 = vshrl.u32 %v2825, 7
    %v2827 = vsub.s32 %v2824, %v2826
    %v2828 = vrot.slane %v2820, %v2827
    %v2830 = vunpack.c.l.s4 1966171168
    %v2831 = vunpack.c.0.s8 %v2830
    %v2832 = vlaneseq
    %v2833 = vshrl.u32 %v2832, 7
    %v2834 = vsub.s32 %v2831, %v2833
    %v2835 = vrot.slane %v2821, %v2834
    %v2836 = vcombine.low %v2828, %v2835
    %v2838 = vunpack.c.l.s4 1966171168
    %v2839 = vunpack.c.0.s8 %v2838
    %v2840 = vlaneseq
    %v2841 = vshrl.u32 %v2840, 7
    %v2842 = vsub.s32 %v2839, %v2841
    %v2843 = vrot.slane %v2836, %v2842
    %2844 = vrot.lane.b32.xlu0 %v2843, 19
    %v2845 = vpop.permute.xlu0 %2844
    %v2846 = vrot.slane %v2845, 1
    %v2847 = vsel %vm2808, %v2845, %v2846
    %2849 = vst.msk [vmem:[#allocation8 + $0x3] sm:$0x7] %vm2814, %v2847
    // Predicated region
    $region30: #{tpu_custom_call.1} parent=1 // pred_check
      _
    $region31: #{tpu_custom_call.1} parent=1 // pred_check_branch
      %2851 = sbr.rel (0) target = $region33
    $region32: #{tpu_custom_call.1} parent=1 // pred_region
      %s2853 = ssub.s32 96, 96
      %2854 = vsyncadd [#allocation7], %s2853
      %s2856 = sshll.u32 [#allocation8], 4
      %s2857 = int_to_ptr.vmem [resolvable:$true] %s2856
      %2859 = dma.vmem_to_hbm [thread:$0]  %s2857, 96, %s6, [#allocation7]
    $region33: #{tpu_custom_call.1} parent=1 // pred_fallthru
      _
    // Predicated region
    $region34: #{tpu_custom_call.1} parent=1 // pred_check
      _
    $region35: #{tpu_custom_call.1} parent=1 // pred_check_branch
      %2861 = sbr.rel (0) target = $region37
    $region36: #{tpu_custom_call.1} parent=1 // pred_region
      %2862 = dma.done [#allocation7], 96
    $region37: #{tpu_custom_call.1} parent=1 // pred_fallthru
      _
    %2863 = vsyncpa [#allocation6], 1
    %2864 = vsyncpa [#allocation7], 1

</llo_original>
